<compile_context>
chip_gen: v5e
topology: v5e:2x2
jax: 0.10.0
libtpu: 0.0.40
codegen_flags: <defaults>
</compile_context>

<pallas_src>
import functools
import math

import jax
import jax.numpy as jnp
from jax.experimental import pallas as pl
from jax.experimental.pallas import tpu as pltpu


# packed (L, 6, D) rows of the per-layer D-wide vectors
_BO, _B2, _G1, _BE1, _G2, _BE2 = range(6)


# ----------------------------- Pallas kernel -----------------------------

def transformer_layers_kernel(x_ref, wqkv_ref, bqkv_ref, wo_ref, w1_ref, b1_ref,
                              w2_ref, dvec_ref, o_ref, *, num_heads):
    layer = pl.program_id(1)

    # First layer of this batch tile: load the embeddings into the resident
    # output block (it carries the activations across the inner layer axis).
    @pl.when(layer == 0)
    def _():
        o_ref[...] = x_ref[...]

    x3 = o_ref[...].astype(jnp.float32)           # (bt, S, D)
    bt, S, D = x3.shape
    H = num_heads
    Dh = D // H
    M = bt * S
    scale = 1.0 / math.sqrt(Dh)

    # Collapse (bt, S) -> M so every projection matmul fills MXU rows.
    # (Layout-free when S % 8 == 0.)
    x = x3.reshape(M, D)

    def layer_norm(v, gamma, beta):
        mu = jnp.mean(v, axis=-1, keepdims=True)
        var = jnp.mean(jnp.square(v - mu), axis=-1, keepdims=True)
        return (v - mu) * jax.lax.rsqrt(var + 1e-5) * gamma + beta

    dv = dvec_ref[...]                            # (6, D) f32
    bo, b2 = dv[_BO:_BO + 1, :], dv[_B2:_B2 + 1, :]
    g1, be1 = dv[_G1:_G1 + 1, :], dv[_BE1:_BE1 + 1, :]
    g2, be2 = dv[_G2:_G2 + 1, :], dv[_BE2:_BE2 + 1, :]

    # ---- fused QKV projection: one (M, D) @ (D, 3D) bf16 MXU pass ----
    qkv = jnp.dot(x.astype(jnp.bfloat16), wqkv_ref[...],
                  preferred_element_type=jnp.float32) + bqkv_ref[...]    # (M, 3D)
    q = (qkv[:, 0 * D:1 * D] * scale).reshape(bt, S, D)   # scale folded into q
    k = qkv[:, 1 * D:2 * D].reshape(bt, S, D)
    v = qkv[:, 2 * D:3 * D].reshape(bt, S, D)

    # ---- multi-head self-attention ----
    # TODO(synk): replace the static head loop with one (bt, H)-batched
    #             contraction once multi-batch-dim dot_general lowers in Mosaic.
    ctx_heads = []
    for h in range(H):                                    # static, small H
        sl = slice(h * Dh, (h + 1) * Dh)
        qh = q[:, :, sl].astype(jnp.bfloat16)
        kh = k[:, :, sl].astype(jnp.bfloat16)
        vh = v[:, :, sl].astype(jnp.bfloat16)
        s = jnp.einsum('bqd,bkd->bqk', qh, kh,
                       preferred_element_type=jnp.float32)               # (bt,S,S)
        s = s - jnp.max(s, axis=-1, keepdims=True)
        p = jnp.exp(s)
        p = p * pl.reciprocal(jnp.sum(p, axis=-1, keepdims=True), approx=True)
        ctx_heads.append(jnp.einsum('bqk,bkd->bqd', p.astype(jnp.bfloat16), vh,
                                    preferred_element_type=jnp.float32))
    # One lane-dim concat + ONE (M, D) @ (D, D) output projection (K = D,
    # not H matmuls with K = Dh).
    ctx = jnp.concatenate(ctx_heads, axis=-1).reshape(M, D)
    attn = jnp.dot(ctx.astype(jnp.bfloat16), wo_ref[...],
                   preferred_element_type=jnp.float32) + bo

    x1 = layer_norm(x + attn, g1, be1)

    # ---- feed-forward ----
    h1 = jnp.maximum(jnp.dot(x1.astype(jnp.bfloat16), w1_ref[...],
                             preferred_element_type=jnp.float32) + b1_ref[...],
                     0.0)                                                 # ReLU
    ffn = jnp.dot(h1.astype(jnp.bfloat16), w2_ref[...],
                  preferred_element_type=jnp.float32) + b2
    x2 = layer_norm(x1 + ffn, g2, be2)

    o_ref[...] = x2.reshape(bt, S, D).astype(o_ref.dtype)


# ----------------------------- wrapper -----------------------------

def _vmem_budget_bytes():
    """Per-generation VMEM budget (leave headroom for compiler scratch)."""
    cap = None
    try:
        cap = getattr(pltpu.get_tpu_info(), "vmem_capacity_bytes", None)
    except Exception:
        cap = None
    if not cap:
        cap = 64 * 1024 * 1024            # conservative (v7x-sized) fallback
    budget = int(cap * 0.85)
    return max(32 * 1024 * 1024, min(budget, 112 * 1024 * 1024))


def _pick_batch_tile(B, S, D, FF, H, budget_bytes):
    """Largest divisor of B whose estimated per-tile VMEM footprint fits."""
    # weights (bf16, double-buffered) + small f32 vectors (double-buffered)
    w_bytes = (2 * 2 * (D * 3 * D + D * D + D * FF + FF * D)
               + 2 * 4 * (3 * D + FF + 6 * D))

    def fits(bt):
        m = bt * S
        act = 2 * 2 * bt * S * D * 4                  # x in + out, dbl-buffered f32
        inter = m * (3 * D + 2 * D + FF) * 4          # qkv / ctx+attn / h1 slabs
        inter += H * bt * S * S * 4                   # per-head score tiles
        return w_bytes + act + inter <= budget_bytes

    best = 1
    for bt in range(1, B + 1):
        if B % bt == 0 and fits(bt):
            best = bt
    return best


def transformer_stack(x, stacked, *, num_heads, batch_tile=None):
    B, S, D = x.shape
    L = stacked["wqkv"].shape[0]
    FF = stacked["w1"].shape[-1]
    assert D % num_heads == 0

    vmem_budget = _vmem_budget_bytes()
    if batch_tile is None:
        batch_tile = _pick_batch_tile(B, S, D, FF, num_heads, vmem_budget)
    assert B % batch_tile == 0

    n_tiles = B // batch_tile
    grid = (n_tiles, L)     # outer: batch tiles (parallel), inner: layers (resident)

    def act_map(b, l):
        return (b, 0, 0)

    def w_map(b, l):
        return (l, 0, 0)

    kernel = functools.partial(transformer_layers_kernel, num_heads=num_heads)

    # advisory cost estimate
    flops = int(L * B * S * (2 * D * 3 * D + 4 * S * D + 2 * D * D + 4 * D * FF))
    transcendentals = int(L * B * num_heads * S * S)
    w_mat_bytes = L * (D * 3 * D + D * D + D * FF + FF * D) * 2        # bf16
    w_vec_bytes = L * (3 * D + FF + 6 * D) * 4                         # f32
    bytes_accessed = int(2 * B * S * D * 4 + n_tiles * (w_mat_bytes + w_vec_bytes))

    return pl.pallas_call(
        kernel,
        grid=grid,
        in_specs=[
            pl.BlockSpec((batch_tile, S, D), act_map),        # x (embeddings)
            pl.BlockSpec((None, D, 3 * D), w_map),            # wqkv (bf16)
            pl.BlockSpec((None, 1, 3 * D), w_map),            # bqkv (f32)
            pl.BlockSpec((None, D, D), w_map),                # wo   (bf16)
            pl.BlockSpec((None, D, FF), w_map),               # w1   (bf16)
            pl.BlockSpec((None, 1, FF), w_map),               # b1   (f32)
            pl.BlockSpec((None, FF, D), w_map),               # w2   (bf16)
            pl.BlockSpec((None, 6, D), w_map),                # packed bo,b2,ln params
        ],
        out_specs=pl.BlockSpec((batch_tile, S, D), act_map),  # resident across layers
        out_shape=jax.ShapeDtypeStruct((B, S, D), x.dtype),
        compiler_params=pltpu.CompilerParams(
            dimension_semantics=("parallel", "arbitrary"),
            vmem_limit_bytes=vmem_budget,
        ),
        cost_estimate=pl.CostEstimate(
            flops=flops, transcendentals=transcendentals,
            bytes_accessed=bytes_accessed),
    )(x, stacked["wqkv"], stacked["bqkv"], stacked["wo"], stacked["w1"],
      stacked["b1"], stacked["w2"], stacked["dvec"])


def base_transformer_forward(params, input_ids, *, num_heads):
    # Embedding gathers + broadcast add are glue: leave them to XLA so they fuse.
    B, S = input_ids.shape
    tok = jnp.take(params["token_emb"], input_ids, axis=0)          # (B, S, D)
    pos = params["pos_emb"][:S][None, :, :]                         # (1, S, D)
    x = tok + pos                                                   # dropout: eval -> identity
    return transformer_stack(x, params["stacked"], num_heads=num_heads)


# ----------------------------- parameter init -----------------------------

def init_params(key, vocab_size, max_pos, d_model, ff_hidden, num_layers):
    D, FF, L = d_model, ff_hidden, num_layers
    keys = jax.random.split(key, 6)

    def w(k, shape, dtype=jnp.float32):
        return (0.02 * jax.random.normal(k, shape, jnp.float32)).astype(dtype)

    dvec = jnp.zeros((L, 6, D), jnp.float32)
    dvec = dvec.at[:, _G1, :].set(1.0)     # LayerNorm1 gamma
    dvec = dvec.at[:, _G2, :].set(1.0)     # LayerNorm2 gamma
    # rows _BO, _B2, _BE1, _BE2 stay zero (biases / betas)

    return {
        "token_emb": w(keys[0], (vocab_size, D)),
        "pos_emb": w(keys[1], (max_pos, D)),
        "stacked": {
            # matmul weights stored bf16: halves weight HBM/VMEM bytes,
            # f32 accumulation kept inside the kernel.
            "wqkv": w(keys[2], (L, D, 3 * D), jnp.bfloat16),    # fused Q|K|V
            "bqkv": jnp.zeros((L, 1, 3 * D), jnp.float32),
            "wo":   w(keys[3], (L, D, D), jnp.bfloat16),
            "w1":   w(keys[4], (L, D, FF), jnp.bfloat16),
            "b1":   jnp.zeros((L, 1, FF), jnp.float32),
            "w2":   w(keys[5], (L, FF, D), jnp.bfloat16),
            "dvec": dvec,                                       # [bo,b2,g1,be1,g2,be2]
        },
    }


# ----------------------------- main -----------------------------

if __name__ == "__main__":
    # config (toy shapes consistent with the module)
    vocab_size = 100
    max_position_embeddings = 32
    d_model = 32
    num_heads = 4
    ff_hidden_size = 64
    num_layers = 2
    # dropout = 0.1  (eval mode -> identity)

    batch, seq = 2, 8

    key = jax.random.PRNGKey(0)
    k_ids, k_params = jax.random.split(key)
    input_ids = jax.random.randint(k_ids, (batch, seq), 0, vocab_size, dtype=jnp.int32)
    params = init_params(k_params, vocab_size, max_position_embeddings,
                         d_model, ff_hidden_size, num_layers)

    out = base_transformer_forward(params, input_ids, num_heads=num_heads)
    out = jax.block_until_ready(out)
    assert out.shape == (batch, seq, d_model)
    assert bool(jnp.all(jnp.isfinite(out)))
    print("KERNEL_OK")
</pallas_src>

<mosaic_0001>
module attributes {stable_mosaic.version = 11 : i64} {
  func.func @transformer_layers_kernel(%arg0: i32, %arg1: i32, %arg2: memref<2x8x32xf32, #tpu.memory_space<vmem>>, %arg3: memref<1x32x96xbf16, #tpu.memory_space<vmem>>, %arg4: memref<1x1x96xf32, #tpu.memory_space<vmem>>, %arg5: memref<1x32x32xbf16, #tpu.memory_space<vmem>>, %arg6: memref<1x32x64xbf16, #tpu.memory_space<vmem>>, %arg7: memref<1x1x64xf32, #tpu.memory_space<vmem>>, %arg8: memref<1x64x32xbf16, #tpu.memory_space<vmem>>, %arg9: memref<1x6x32xf32, #tpu.memory_space<vmem>>, %arg10: memref<2x8x32xf32, #tpu.memory_space<vmem>>) attributes {dimension_semantics = [#tpu.dimension_semantics<parallel>, #tpu.dimension_semantics<arbitrary>], iteration_bounds = array<i64: 1, 2>, scalar_prefetch = 0 : i64, scratch_operands = 0 : i64, tpu.core_type = #tpu.core_type<tc>, window_params = [{transform_indices = @transform_0, window_bounds = array<i64: 2, 8, 32>}, {transform_indices = @transform_1, window_bounds = array<i64: 1, 32, 96>}, {transform_indices = @transform_2, window_bounds = array<i64: 1, 1, 96>}, {transform_indices = @transform_3, window_bounds = array<i64: 1, 32, 32>}, {transform_indices = @transform_4, window_bounds = array<i64: 1, 32, 64>}, {transform_indices = @transform_5, window_bounds = array<i64: 1, 1, 64>}, {transform_indices = @transform_6, window_bounds = array<i64: 1, 64, 32>}, {transform_indices = @transform_7, window_bounds = array<i64: 1, 6, 32>}, {transform_indices = @transform_8, window_bounds = array<i64: 2, 8, 32>}]} {
    %c0_i32 = arith.constant 0 : i32
    %0 = arith.cmpi eq, %arg1, %c0_i32 : i32
    %1 = arith.extui %0 : i1 to i32
    %c0_i32_0 = arith.constant 0 : i32
    %2 = arith.cmpi ne, %1, %c0_i32_0 : i32
    scf.if %2 {
      %c0_58 = arith.constant 0 : index
      %c0_59 = arith.constant 0 : index
      %c0_60 = arith.constant 0 : index
      %177 = vector.load %arg2[%c0_58, %c0_59, %c0_60] : memref<2x8x32xf32, #tpu.memory_space<vmem>>, vector<2x8x32xf32>
      %c0_61 = arith.constant 0 : index
      %c0_62 = arith.constant 0 : index
      %c0_63 = arith.constant 0 : index
      %178 = vector.load %arg10[%c0_61, %c0_62, %c0_63] : memref<2x8x32xf32, #tpu.memory_space<vmem>>, vector<2x8x32xf32>
      tpu.vector_store %arg10[%c0_61, %c0_62, %c0_63], %177 {strides = array<i32>} : memref<2x8x32xf32, #tpu.memory_space<vmem>>, vector<2x8x32xf32>,
    } else {
    }
    %c0 = arith.constant 0 : index
    %c0_1 = arith.constant 0 : index
    %c0_2 = arith.constant 0 : index
    %3 = vector.load %arg10[%c0, %c0_1, %c0_2] : memref<2x8x32xf32, #tpu.memory_space<vmem>>, vector<2x8x32xf32>
    %4 = vector.shape_cast %3 : vector<2x8x32xf32> to vector<16x32xf32>
    %c0_3 = arith.constant 0 : index
    %c0_4 = arith.constant 0 : index
    %c0_5 = arith.constant 0 : index
    %5 = vector.load %arg9[%c0_3, %c0_4, %c0_5] : memref<1x6x32xf32, #tpu.memory_space<vmem>>, vector<1x6x32xf32>
    %6 = vector.shape_cast %5 : vector<1x6x32xf32> to vector<6x32xf32>
    %7 = vector.extract_strided_slice %6 {offsets = [0, 0], sizes = [1, 32], strides = [1, 1]} : vector<6x32xf32> to vector<1x32xf32>
    %8 = vector.extract_strided_slice %6 {offsets = [1, 0], sizes = [1, 32], strides = [1, 1]} : vector<6x32xf32> to vector<1x32xf32>
    %9 = vector.extract_strided_slice %6 {offsets = [2, 0], sizes = [1, 32], strides = [1, 1]} : vector<6x32xf32> to vector<1x32xf32>
    %10 = vector.extract_strided_slice %6 {offsets = [3, 0], sizes = [1, 32], strides = [1, 1]} : vector<6x32xf32> to vector<1x32xf32>
    %11 = vector.extract_strided_slice %6 {offsets = [4, 0], sizes = [1, 32], strides = [1, 1]} : vector<6x32xf32> to vector<1x32xf32>
    %12 = vector.extract_strided_slice %6 {offsets = [5, 0], sizes = [1, 32], strides = [1, 1]} : vector<6x32xf32> to vector<1x32xf32>
    %13 = arith.truncf %4 : vector<16x32xf32> to vector<16x32xbf16>
    %c0_6 = arith.constant 0 : index
    %c0_7 = arith.constant 0 : index
    %c0_8 = arith.constant 0 : index
    %14 = vector.load %arg3[%c0_6, %c0_7, %c0_8] : memref<1x32x96xbf16, #tpu.memory_space<vmem>>, vector<1x32x96xbf16>
    %15 = vector.shape_cast %14 : vector<1x32x96xbf16> to vector<32x96xbf16>
    %cst = arith.constant dense<0.000000e+00> : vector<16x96xf32>
    %16 = tpu.matmul %13, %15, %cst {dimension_numbers = #tpu.dot_dimension_numbers<[1], [0], [0], [1], [0, 0, 1, 1], [], []>} : vector<16x32xbf16>, vector<32x96xbf16>, vector<16x96xf32> -> vector<16x96xf32>
    %c0_9 = arith.constant 0 : index
    %c0_10 = arith.constant 0 : index
    %c0_11 = arith.constant 0 : index
    %17 = vector.load %arg4[%c0_9, %c0_10, %c0_11] : memref<1x1x96xf32, #tpu.memory_space<vmem>>, vector<1x1x96xf32>
    %18 = vector.shape_cast %17 : vector<1x1x96xf32> to vector<1x96xf32>
    %19 = vector.broadcast %18 : vector<1x96xf32> to vector<16x96xf32>
    %20 = arith.addf %16, %19 : vector<16x96xf32>
    %21 = vector.extract_strided_slice %20 {offsets = [0, 0], sizes = [16, 32], strides = [1, 1]} : vector<16x96xf32> to vector<16x32xf32>
    %cst_12 = arith.constant 0.353553385 : f32
    %22 = vector.broadcast %cst_12 : f32 to vector<16x32xf32>
    %23 = arith.mulf %21, %22 : vector<16x32xf32>
    %24 = vector.shape_cast %23 : vector<16x32xf32> to vector<2x8x32xf32>
    %25 = vector.extract_strided_slice %20 {offsets = [0, 32], sizes = [16, 32], strides = [1, 1]} : vector<16x96xf32> to vector<16x32xf32>
    %26 = vector.shape_cast %25 : vector<16x32xf32> to vector<2x8x32xf32>
    %27 = vector.extract_strided_slice %20 {offsets = [0, 64], sizes = [16, 32], strides = [1, 1]} : vector<16x96xf32> to vector<16x32xf32>
    %28 = vector.shape_cast %27 : vector<16x32xf32> to vector<2x8x32xf32>
    %29 = vector.extract_strided_slice %24 {offsets = [0, 0, 0], sizes = [2, 8, 8], strides = [1, 1, 1]} : vector<2x8x32xf32> to vector<2x8x8xf32>
    %30 = arith.truncf %29 : vector<2x8x8xf32> to vector<2x8x8xbf16>
    %31 = vector.extract_strided_slice %26 {offsets = [0, 0, 0], sizes = [2, 8, 8], strides = [1, 1, 1]} : vector<2x8x32xf32> to vector<2x8x8xf32>
    %32 = arith.truncf %31 : vector<2x8x8xf32> to vector<2x8x8xbf16>
    %33 = vector.extract_strided_slice %28 {offsets = [0, 0, 0], sizes = [2, 8, 8], strides = [1, 1, 1]} : vector<2x8x32xf32> to vector<2x8x8xf32>
    %34 = arith.truncf %33 : vector<2x8x8xf32> to vector<2x8x8xbf16>
    "tpu.trace_start"() <{level = 10 : i32, message = "bqd,bkd->bqk"}> : () -> ()
    %cst_13 = arith.constant dense<0.000000e+00> : vector<2x8x8xf32>
    %35 = tpu.matmul %30, %32, %cst_13 {dimension_numbers = #tpu.dot_dimension_numbers<[2], [2], [1], [1], [0, 0, 0, 1, 1, 1], [0], [0]>} : vector<2x8x8xbf16>, vector<2x8x8xbf16>, vector<2x8x8xf32> -> vector<2x8x8xf32>
    "tpu.trace_stop"() : () -> ()
    %cst_14 = arith.constant dense<0xFF800000> : vector<2x8xf32>
    %36 = vector.multi_reduction <maximumf>, %35, %cst_14 [2] : vector<2x8x8xf32> to vector<2x8xf32>
    %37 = vector.shape_cast %36 : vector<2x8xf32> to vector<2x8x1xf32>
    %38 = vector.broadcast %37 : vector<2x8x1xf32> to vector<2x8x8xf32>
    %39 = arith.subf %35, %38 : vector<2x8x8xf32>
    %40 = math.exp %39 : vector<2x8x8xf32>
    %cst_15 = arith.constant dense<0.000000e+00> : vector<2x8xf32>
    %41 = vector.multi_reduction <add>, %40, %cst_15 [2] : vector<2x8x8xf32> to vector<2x8xf32>
    %42 = vector.shape_cast %41 : vector<2x8xf32> to vector<2x8x1xf32>
    %43 = tpu.reciprocal %42 {approx = true} : vector<2x8x1xf32> -> vector<2x8x1xf32>
    %44 = vector.broadcast %43 : vector<2x8x1xf32> to vector<2x8x8xf32>
    %45 = arith.mulf %40, %44 : vector<2x8x8xf32>
    %46 = arith.truncf %45 : vector<2x8x8xf32> to vector<2x8x8xbf16>
    "tpu.trace_start"() <{level = 10 : i32, message = "bqk,bkd->bqd"}> : () -> ()
    %cst_16 = arith.constant dense<0.000000e+00> : vector<2x8x8xf32>
    %47 = tpu.matmul %46, %34, %cst_16 {dimension_numbers = #tpu.dot_dimension_numbers<[2], [1], [1], [2], [0, 0, 0, 1, 1, 2], [0], [0]>} : vector<2x8x8xbf16>, vector<2x8x8xbf16>, vector<2x8x8xf32> -> vector<2x8x8xf32>
    "tpu.trace_stop"() : () -> ()
    %48 = vector.extract_strided_slice %24 {offsets = [0, 0, 8], sizes = [2, 8, 8], strides = [1, 1, 1]} : vector<2x8x32xf32> to vector<2x8x8xf32>
    %49 = arith.truncf %48 : vector<2x8x8xf32> to vector<2x8x8xbf16>
    %50 = vector.extract_strided_slice %26 {offsets = [0, 0, 8], sizes = [2, 8, 8], strides = [1, 1, 1]} : vector<2x8x32xf32> to vector<2x8x8xf32>
    %51 = arith.truncf %50 : vector<2x8x8xf32> to vector<2x8x8xbf16>
    %52 = vector.extract_strided_slice %28 {offsets = [0, 0, 8], sizes = [2, 8, 8], strides = [1, 1, 1]} : vector<2x8x32xf32> to vector<2x8x8xf32>
    %53 = arith.truncf %52 : vector<2x8x8xf32> to vector<2x8x8xbf16>
    "tpu.trace_start"() <{level = 10 : i32, message = "bqd,bkd->bqk"}> : () -> ()
    %cst_17 = arith.constant dense<0.000000e+00> : vector<2x8x8xf32>
    %54 = tpu.matmul %49, %51, %cst_17 {dimension_numbers = #tpu.dot_dimension_numbers<[2], [2], [1], [1], [0, 0, 0, 1, 1, 1], [0], [0]>} : vector<2x8x8xbf16>, vector<2x8x8xbf16>, vector<2x8x8xf32> -> vector<2x8x8xf32>
    "tpu.trace_stop"() : () -> ()
    %cst_18 = arith.constant dense<0xFF800000> : vector<2x8xf32>
    %55 = vector.multi_reduction <maximumf>, %54, %cst_18 [2] : vector<2x8x8xf32> to vector<2x8xf32>
    %56 = vector.shape_cast %55 : vector<2x8xf32> to vector<2x8x1xf32>
    %57 = vector.broadcast %56 : vector<2x8x1xf32> to vector<2x8x8xf32>
    %58 = arith.subf %54, %57 : vector<2x8x8xf32>
    %59 = math.exp %58 : vector<2x8x8xf32>
    %cst_19 = arith.constant dense<0.000000e+00> : vector<2x8xf32>
    %60 = vector.multi_reduction <add>, %59, %cst_19 [2] : vector<2x8x8xf32> to vector<2x8xf32>
    %61 = vector.shape_cast %60 : vector<2x8xf32> to vector<2x8x1xf32>
    %62 = tpu.reciprocal %61 {approx = true} : vector<2x8x1xf32> -> vector<2x8x1xf32>
    %63 = vector.broadcast %62 : vector<2x8x1xf32> to vector<2x8x8xf32>
    %64 = arith.mulf %59, %63 : vector<2x8x8xf32>
    %65 = arith.truncf %64 : vector<2x8x8xf32> to vector<2x8x8xbf16>
    "tpu.trace_start"() <{level = 10 : i32, message = "bqk,bkd->bqd"}> : () -> ()
    %cst_20 = arith.constant dense<0.000000e+00> : vector<2x8x8xf32>
    %66 = tpu.matmul %65, %53, %cst_20 {dimension_numbers = #tpu.dot_dimension_numbers<[2], [1], [1], [2], [0, 0, 0, 1, 1, 2], [0], [0]>} : vector<2x8x8xbf16>, vector<2x8x8xbf16>, vector<2x8x8xf32> -> vector<2x8x8xf32>
    "tpu.trace_stop"() : () -> ()
    %67 = vector.extract_strided_slice %24 {offsets = [0, 0, 16], sizes = [2, 8, 8], strides = [1, 1, 1]} : vector<2x8x32xf32> to vector<2x8x8xf32>
    %68 = arith.truncf %67 : vector<2x8x8xf32> to vector<2x8x8xbf16>
    %69 = vector.extract_strided_slice %26 {offsets = [0, 0, 16], sizes = [2, 8, 8], strides = [1, 1, 1]} : vector<2x8x32xf32> to vector<2x8x8xf32>
    %70 = arith.truncf %69 : vector<2x8x8xf32> to vector<2x8x8xbf16>
    %71 = vector.extract_strided_slice %28 {offsets = [0, 0, 16], sizes = [2, 8, 8], strides = [1, 1, 1]} : vector<2x8x32xf32> to vector<2x8x8xf32>
    %72 = arith.truncf %71 : vector<2x8x8xf32> to vector<2x8x8xbf16>
    "tpu.trace_start"() <{level = 10 : i32, message = "bqd,bkd->bqk"}> : () -> ()
    %cst_21 = arith.constant dense<0.000000e+00> : vector<2x8x8xf32>
    %73 = tpu.matmul %68, %70, %cst_21 {dimension_numbers = #tpu.dot_dimension_numbers<[2], [2], [1], [1], [0, 0, 0, 1, 1, 1], [0], [0]>} : vector<2x8x8xbf16>, vector<2x8x8xbf16>, vector<2x8x8xf32> -> vector<2x8x8xf32>
    "tpu.trace_stop"() : () -> ()
    %cst_22 = arith.constant dense<0xFF800000> : vector<2x8xf32>
    %74 = vector.multi_reduction <maximumf>, %73, %cst_22 [2] : vector<2x8x8xf32> to vector<2x8xf32>
    %75 = vector.shape_cast %74 : vector<2x8xf32> to vector<2x8x1xf32>
    %76 = vector.broadcast %75 : vector<2x8x1xf32> to vector<2x8x8xf32>
    %77 = arith.subf %73, %76 : vector<2x8x8xf32>
    %78 = math.exp %77 : vector<2x8x8xf32>
    %cst_23 = arith.constant dense<0.000000e+00> : vector<2x8xf32>
    %79 = vector.multi_reduction <add>, %78, %cst_23 [2] : vector<2x8x8xf32> to vector<2x8xf32>
    %80 = vector.shape_cast %79 : vector<2x8xf32> to vector<2x8x1xf32>
    %81 = tpu.reciprocal %80 {approx = true} : vector<2x8x1xf32> -> vector<2x8x1xf32>
    %82 = vector.broadcast %81 : vector<2x8x1xf32> to vector<2x8x8xf32>
    %83 = arith.mulf %78, %82 : vector<2x8x8xf32>
    %84 = arith.truncf %83 : vector<2x8x8xf32> to vector<2x8x8xbf16>
    "tpu.trace_start"() <{level = 10 : i32, message = "bqk,bkd->bqd"}> : () -> ()
    %cst_24 = arith.constant dense<0.000000e+00> : vector<2x8x8xf32>
    %85 = tpu.matmul %84, %72, %cst_24 {dimension_numbers = #tpu.dot_dimension_numbers<[2], [1], [1], [2], [0, 0, 0, 1, 1, 2], [0], [0]>} : vector<2x8x8xbf16>, vector<2x8x8xbf16>, vector<2x8x8xf32> -> vector<2x8x8xf32>
    "tpu.trace_stop"() : () -> ()
    %86 = vector.extract_strided_slice %24 {offsets = [0, 0, 24], sizes = [2, 8, 8], strides = [1, 1, 1]} : vector<2x8x32xf32> to vector<2x8x8xf32>
    %87 = arith.truncf %86 : vector<2x8x8xf32> to vector<2x8x8xbf16>
    %88 = vector.extract_strided_slice %26 {offsets = [0, 0, 24], sizes = [2, 8, 8], strides = [1, 1, 1]} : vector<2x8x32xf32> to vector<2x8x8xf32>
    %89 = arith.truncf %88 : vector<2x8x8xf32> to vector<2x8x8xbf16>
    %90 = vector.extract_strided_slice %28 {offsets = [0, 0, 24], sizes = [2, 8, 8], strides = [1, 1, 1]} : vector<2x8x32xf32> to vector<2x8x8xf32>
    %91 = arith.truncf %90 : vector<2x8x8xf32> to vector<2x8x8xbf16>
    "tpu.trace_start"() <{level = 10 : i32, message = "bqd,bkd->bqk"}> : () -> ()
    %cst_25 = arith.constant dense<0.000000e+00> : vector<2x8x8xf32>
    %92 = tpu.matmul %87, %89, %cst_25 {dimension_numbers = #tpu.dot_dimension_numbers<[2], [2], [1], [1], [0, 0, 0, 1, 1, 1], [0], [0]>} : vector<2x8x8xbf16>, vector<2x8x8xbf16>, vector<2x8x8xf32> -> vector<2x8x8xf32>
    "tpu.trace_stop"() : () -> ()
    %cst_26 = arith.constant dense<0xFF800000> : vector<2x8xf32>
    %93 = vector.multi_reduction <maximumf>, %92, %cst_26 [2] : vector<2x8x8xf32> to vector<2x8xf32>
    %94 = vector.shape_cast %93 : vector<2x8xf32> to vector<2x8x1xf32>
    %95 = vector.broadcast %94 : vector<2x8x1xf32> to vector<2x8x8xf32>
    %96 = arith.subf %92, %95 : vector<2x8x8xf32>
    %97 = math.exp %96 : vector<2x8x8xf32>
    %cst_27 = arith.constant dense<0.000000e+00> : vector<2x8xf32>
    %98 = vector.multi_reduction <add>, %97, %cst_27 [2] : vector<2x8x8xf32> to vector<2x8xf32>
    %99 = vector.shape_cast %98 : vector<2x8xf32> to vector<2x8x1xf32>
    %100 = tpu.reciprocal %99 {approx = true} : vector<2x8x1xf32> -> vector<2x8x1xf32>
    %101 = vector.broadcast %100 : vector<2x8x1xf32> to vector<2x8x8xf32>
    %102 = arith.mulf %97, %101 : vector<2x8x8xf32>
    %103 = arith.truncf %102 : vector<2x8x8xf32> to vector<2x8x8xbf16>
    "tpu.trace_start"() <{level = 10 : i32, message = "bqk,bkd->bqd"}> : () -> ()
    %cst_28 = arith.constant dense<0.000000e+00> : vector<2x8x8xf32>
    %104 = tpu.matmul %103, %91, %cst_28 {dimension_numbers = #tpu.dot_dimension_numbers<[2], [1], [1], [2], [0, 0, 0, 1, 1, 2], [0], [0]>} : vector<2x8x8xbf16>, vector<2x8x8xbf16>, vector<2x8x8xf32> -> vector<2x8x8xf32>
    "tpu.trace_stop"() : () -> ()
    %105 = tpu.concatenate %47, %66, %85, %104 in 2 : vector<2x8x8xf32>, vector<2x8x8xf32>, vector<2x8x8xf32>, vector<2x8x8xf32> -> vector<2x8x32xf32>
    %106 = vector.shape_cast %105 : vector<2x8x32xf32> to vector<16x32xf32>
    %107 = arith.truncf %106 : vector<16x32xf32> to vector<16x32xbf16>
    %c0_29 = arith.constant 0 : index
    %c0_30 = arith.constant 0 : index
    %c0_31 = arith.constant 0 : index
    %108 = vector.load %arg5[%c0_29, %c0_30, %c0_31] : memref<1x32x32xbf16, #tpu.memory_space<vmem>>, vector<1x32x32xbf16>
    %109 = vector.shape_cast %108 : vector<1x32x32xbf16> to vector<32x32xbf16>
    %cst_32 = arith.constant dense<0.000000e+00> : vector<16x32xf32>
    %110 = tpu.matmul %107, %109, %cst_32 {dimension_numbers = #tpu.dot_dimension_numbers<[1], [0], [0], [1], [0, 0, 1, 1], [], []>} : vector<16x32xbf16>, vector<32x32xbf16>, vector<16x32xf32> -> vector<16x32xf32>
    %111 = vector.broadcast %7 : vector<1x32xf32> to vector<16x32xf32>
    %112 = arith.addf %110, %111 : vector<16x32xf32>
    %113 = arith.addf %4, %112 : vector<16x32xf32>
    %cst_33 = arith.constant dense<0.000000e+00> : vector<16xf32>
    %114 = vector.multi_reduction <add>, %113, %cst_33 [1] : vector<16x32xf32> to vector<16xf32>
    %115 = vector.shape_cast %114 : vector<16xf32> to vector<16x1xf32>
    %cst_34 = arith.constant 3.200000e+01 : f32
    %116 = vector.broadcast %cst_34 : f32 to vector<16x1xf32>
    %117 = arith.divf %115, %116 : vector<16x1xf32>
    %118 = vector.broadcast %117 : vector<16x1xf32> to vector<16x32xf32>
    %119 = arith.subf %113, %118 : vector<16x32xf32>
    %120 = arith.mulf %119, %119 : vector<16x32xf32>
    %cst_35 = arith.constant dense<0.000000e+00> : vector<16xf32>
    %121 = vector.multi_reduction <add>, %120, %cst_35 [1] : vector<16x32xf32> to vector<16xf32>
    %122 = vector.shape_cast %121 : vector<16xf32> to vector<16x1xf32>
    %cst_36 = arith.constant 3.200000e+01 : f32
    %123 = vector.broadcast %cst_36 : f32 to vector<16x1xf32>
    %124 = arith.divf %122, %123 : vector<16x1xf32>
    %125 = vector.broadcast %117 : vector<16x1xf32> to vector<16x32xf32>
    %126 = arith.subf %113, %125 : vector<16x32xf32>
    %cst_37 = arith.constant 9.99999974E-6 : f32
    %127 = vector.broadcast %cst_37 : f32 to vector<16x1xf32>
    %128 = arith.addf %124, %127 : vector<16x1xf32>
    %129 = math.rsqrt %128 : vector<16x1xf32>
    %130 = vector.broadcast %129 : vector<16x1xf32> to vector<16x32xf32>
    %131 = arith.mulf %126, %130 : vector<16x32xf32>
    %132 = vector.broadcast %9 : vector<1x32xf32> to vector<16x32xf32>
    %133 = arith.mulf %131, %132 : vector<16x32xf32>
    %134 = vector.broadcast %10 : vector<1x32xf32> to vector<16x32xf32>
    %135 = arith.addf %133, %134 : vector<16x32xf32>
    %136 = arith.truncf %135 : vector<16x32xf32> to vector<16x32xbf16>
    %c0_38 = arith.constant 0 : index
    %c0_39 = arith.constant 0 : index
    %c0_40 = arith.constant 0 : index
    %137 = vector.load %arg6[%c0_38, %c0_39, %c0_40] : memref<1x32x64xbf16, #tpu.memory_space<vmem>>, vector<1x32x64xbf16>
    %138 = vector.shape_cast %137 : vector<1x32x64xbf16> to vector<32x64xbf16>
    %cst_41 = arith.constant dense<0.000000e+00> : vector<16x64xf32>
    %139 = tpu.matmul %136, %138, %cst_41 {dimension_numbers = #tpu.dot_dimension_numbers<[1], [0], [0], [1], [0, 0, 1, 1], [], []>} : vector<16x32xbf16>, vector<32x64xbf16>, vector<16x64xf32> -> vector<16x64xf32>
    %c0_42 = arith.constant 0 : index
    %c0_43 = arith.constant 0 : index
    %c0_44 = arith.constant 0 : index
    %140 = vector.load %arg7[%c0_42, %c0_43, %c0_44] : memref<1x1x64xf32, #tpu.memory_space<vmem>>, vector<1x1x64xf32>
    %141 = vector.shape_cast %140 : vector<1x1x64xf32> to vector<1x64xf32>
    %142 = vector.broadcast %141 : vector<1x64xf32> to vector<16x64xf32>
    %143 = arith.addf %139, %142 : vector<16x64xf32>
    %cst_45 = arith.constant 0.000000e+00 : f32
    %144 = vector.broadcast %cst_45 : f32 to vector<16x64xf32>
    %145 = arith.maximumf %143, %144 : vector<16x64xf32>
    %146 = arith.truncf %145 : vector<16x64xf32> to vector<16x64xbf16>
    %c0_46 = arith.constant 0 : index
    %c0_47 = arith.constant 0 : index
    %c0_48 = arith.constant 0 : index
    %147 = vector.load %arg8[%c0_46, %c0_47, %c0_48] : memref<1x64x32xbf16, #tpu.memory_space<vmem>>, vector<1x64x32xbf16>
    %148 = vector.shape_cast %147 : vector<1x64x32xbf16> to vector<64x32xbf16>
    %cst_49 = arith.constant dense<0.000000e+00> : vector<16x32xf32>
    %149 = tpu.matmul %146, %148, %cst_49 {dimension_numbers = #tpu.dot_dimension_numbers<[1], [0], [0], [1], [0, 0, 1, 1], [], []>} : vector<16x64xbf16>, vector<64x32xbf16>, vector<16x32xf32> -> vector<16x32xf32>
    %150 = vector.broadcast %8 : vector<1x32xf32> to vector<16x32xf32>
    %151 = arith.addf %149, %150 : vector<16x32xf32>
    %152 = arith.addf %135, %151 : vector<16x32xf32>
    %cst_50 = arith.constant dense<0.000000e+00> : vector<16xf32>
    %153 = vector.multi_reduction <add>, %152, %cst_50 [1] : vector<16x32xf32> to vector<16xf32>
    %154 = vector.shape_cast %153 : vector<16xf32> to vector<16x1xf32>
    %cst_51 = arith.constant 3.200000e+01 : f32
    %155 = vector.broadcast %cst_51 : f32 to vector<16x1xf32>
    %156 = arith.divf %154, %155 : vector<16x1xf32>
    %157 = vector.broadcast %156 : vector<16x1xf32> to vector<16x32xf32>
    %158 = arith.subf %152, %157 : vector<16x32xf32>
    %159 = arith.mulf %158, %158 : vector<16x32xf32>
    %cst_52 = arith.constant dense<0.000000e+00> : vector<16xf32>
    %160 = vector.multi_reduction <add>, %159, %cst_52 [1] : vector<16x32xf32> to vector<16xf32>
    %161 = vector.shape_cast %160 : vector<16xf32> to vector<16x1xf32>
    %cst_53 = arith.constant 3.200000e+01 : f32
    %162 = vector.broadcast %cst_53 : f32 to vector<16x1xf32>
    %163 = arith.divf %161, %162 : vector<16x1xf32>
    %164 = vector.broadcast %156 : vector<16x1xf32> to vector<16x32xf32>
    %165 = arith.subf %152, %164 : vector<16x32xf32>
    %cst_54 = arith.constant 9.99999974E-6 : f32
    %166 = vector.broadcast %cst_54 : f32 to vector<16x1xf32>
    %167 = arith.addf %163, %166 : vector<16x1xf32>
    %168 = math.rsqrt %167 : vector<16x1xf32>
    %169 = vector.broadcast %168 : vector<16x1xf32> to vector<16x32xf32>
    %170 = arith.mulf %165, %169 : vector<16x32xf32>
    %171 = vector.broadcast %11 : vector<1x32xf32> to vector<16x32xf32>
    %172 = arith.mulf %170, %171 : vector<16x32xf32>
    %173 = vector.broadcast %12 : vector<1x32xf32> to vector<16x32xf32>
    %174 = arith.addf %172, %173 : vector<16x32xf32>
    %175 = vector.shape_cast %174 : vector<16x32xf32> to vector<2x8x32xf32>
    %c0_55 = arith.constant 0 : index
    %c0_56 = arith.constant 0 : index
    %c0_57 = arith.constant 0 : index
    %176 = vector.load %arg10[%c0_55, %c0_56, %c0_57] : memref<2x8x32xf32, #tpu.memory_space<vmem>>, vector<2x8x32xf32>
    tpu.vector_store %arg10[%c0_55, %c0_56, %c0_57], %175 {strides = array<i32>} : memref<2x8x32xf32, #tpu.memory_space<vmem>>, vector<2x8x32xf32>,
    return
  }
  func.func @transform_0(%arg0: i32, %arg1: i32) -> (i32, i32, i32) {
    %c0_i32 = arith.constant 0 : i32
    %c0_i32_0 = arith.constant 0 : i32
    %c0_i32_1 = arith.constant 0 : i32
    return %arg0, %c0_i32, %c0_i32_0 : i32, i32, i32
  }
  func.func @transform_1(%arg0: i32, %arg1: i32) -> (i32, i32, i32) {
    %c0_i32 = arith.constant 0 : i32
    %c0_i32_0 = arith.constant 0 : i32
    %c0_i32_1 = arith.constant 0 : i32
    return %arg1, %c0_i32, %c0_i32_0 : i32, i32, i32
  }
  func.func @transform_2(%arg0: i32, %arg1: i32) -> (i32, i32, i32) {
    %c0_i32 = arith.constant 0 : i32
    %c0_i32_0 = arith.constant 0 : i32
    %c0_i32_1 = arith.constant 0 : i32
    return %arg1, %c0_i32, %c0_i32_0 : i32, i32, i32
  }
  func.func @transform_3(%arg0: i32, %arg1: i32) -> (i32, i32, i32) {
    %c0_i32 = arith.constant 0 : i32
    %c0_i32_0 = arith.constant 0 : i32
    %c0_i32_1 = arith.constant 0 : i32
    return %arg1, %c0_i32, %c0_i32_0 : i32, i32, i32
  }
  func.func @transform_4(%arg0: i32, %arg1: i32) -> (i32, i32, i32) {
    %c0_i32 = arith.constant 0 : i32
    %c0_i32_0 = arith.constant 0 : i32
    %c0_i32_1 = arith.constant 0 : i32
    return %arg1, %c0_i32, %c0_i32_0 : i32, i32, i32
  }
  func.func @transform_5(%arg0: i32, %arg1: i32) -> (i32, i32, i32) {
    %c0_i32 = arith.constant 0 : i32
    %c0_i32_0 = arith.constant 0 : i32
    %c0_i32_1 = arith.constant 0 : i32
    return %arg1, %c0_i32, %c0_i32_0 : i32, i32, i32
  }
  func.func @transform_6(%arg0: i32, %arg1: i32) -> (i32, i32, i32) {
    %c0_i32 = arith.constant 0 : i32
    %c0_i32_0 = arith.constant 0 : i32
    %c0_i32_1 = arith.constant 0 : i32
    return %arg1, %c0_i32, %c0_i32_0 : i32, i32, i32
  }
  func.func @transform_7(%arg0: i32, %arg1: i32) -> (i32, i32, i32) {
    %c0_i32 = arith.constant 0 : i32
    %c0_i32_0 = arith.constant 0 : i32
    %c0_i32_1 = arith.constant 0 : i32
    return %arg1, %c0_i32, %c0_i32_0 : i32, i32, i32
  }
  func.func @transform_8(%arg0: i32, %arg1: i32) -> (i32, i32, i32) {
    %c0_i32 = arith.constant 0 : i32
    %c0_i32_0 = arith.constant 0 : i32
    %c0_i32_1 = arith.constant 0 : i32
    return %arg0, %c0_i32, %c0_i32_0 : i32, i32, i32
  }
}

</mosaic_0001>

<llo_original>
// kernel: tpu_custom_call.1
$region0: #{tpu_custom_call.1}
  #allocation0 [shape = 'u32[]', space=smem, size = 0x4, offset = 0x4, fixed_abs, tag = 'smem constant byte address 0x4 - core index']
  #allocation1 [shape = 'u32[72,128]{1,0:T(1,128)}', space=vmem, size = 0x9000, scoped, tag = 'internal scratch']
  %s0 = inlined_call_operand.hbm [shape: f32[2,8,32], index: 0, kind: input, shape index: {}]
  %s1 = inlined_call_operand.vmem [shape: bf16[2,32,96], index: 1, kind: input, shape index: {}]
  %s2 = inlined_call_operand.hbm [shape: f32[2,1,96], index: 2, kind: input, shape index: {}]
  %s3 = inlined_call_operand.vmem [shape: bf16[2,32,32], index: 3, kind: input, shape index: {}]
  %s4 = inlined_call_operand.vmem [shape: bf16[2,32,64], index: 4, kind: input, shape index: {}]
  %s5 = inlined_call_operand.hbm [shape: f32[2,1,64], index: 5, kind: input, shape index: {}]
  %s6 = inlined_call_operand.vmem [shape: bf16[2,64,32], index: 6, kind: input, shape index: {}]
  %s7 = inlined_call_operand.vmem [shape: f32[2,6,32], index: 7, kind: input, shape index: {}]
  %s8 = inlined_call_operand.hbm [shape: f32[2,8,32], index: 8, kind: output, shape index: {}]
  %s9 = sld [smem:[#allocation0]]
  $region81: #{tpu_custom_call.1} parent=0
    _
  %s11 = ssub.s32 1, %s9
  %s12 = scalar_select 0, %s11, %s9
  $region1: #{tpu_custom_call.1} parent=0
    #allocation2 [shape = 'u8[8192]{0}', space=vmem, size = 0x2000, scoped, tag = 'input window, operand 0, single buffered']
    #allocation3 [shape = 's32[2]{0}', space=sflag, size = 0x8, scoped, tag = 'scoped memory for tpu_custom_call.1']
    #allocation4 [shape = 's32[2]{0}', space=sflag, size = 0x8, scoped, tag = 'scoped memory for tpu_custom_call.1']
    #allocation5 [shape = 'u8[1024]{0}', space=vmem, size = 0x400, scoped, tag = 'input window, operand 2']
    #allocation6 [shape = 's32[2]{0}', space=sflag, size = 0x8, scoped, tag = 'scoped memory for tpu_custom_call.1']
    #allocation7 [shape = 'u8[1024]{0}', space=vmem, size = 0x400, scoped, tag = 'input window, operand 5']
    #allocation8 [shape = 'u8[8192]{0}', space=vmem, size = 0x2000, scoped, tag = 'output window, operand 0, single buffered']
    %13 = vsyncpa [#allocation3], 0
    %14 = vsyncpa [#allocation6], 0
    %s15 = scalar_lea.sflag [#allocation6], 1
    %16 = vsyncpa %s15, 0
    %17 = vsyncpa [#allocation4], 0
    loop: start=0, step=1, limit=4
    $region2: #{tpu_custom_call.1} parent=1 // loop_pre_header
      _
    $region3: #{tpu_custom_call.1} parent=1 // loop_header
      %s19 = sphi 0, %s23
      %p20 = scmp.ge.s32.totalorder %s19, 4
      %s26 = sphi 0, %s38
      %s27 = sphi 0, %s34
      %s28 = sphi 0, %s26
      %s29 = sphi 0, %s27
      %s30 = sphi 0, %s28
      %s31 = sphi 0, %s29
      %s41 = sphi 0, %s43
      %s44 = sphi 0, %s41
      %s45 = sphi 0, %s44
      %s61 = sphi 0, %s45
      %s67 = sphi 0, %s69
      %s70 = sphi 0, %s67
      %s71 = sphi 0, %s70
      %s87 = sphi 0, %s71
      %s93 = sphi 0, %s95
      %s96 = sphi 0, %s93
      %s97 = sphi 0, %s96
      %s113 = sphi 0, %s97
      %s119 = sphi 0, %s121
      %s122 = sphi 0, %s119
      %s123 = sphi 0, %s122
      %s139 = sphi 0, %s123
      %s145 = sphi 0, %s147
      %s148 = sphi 0, %s145
      %s149 = sphi 0, %s148
      %s165 = sphi 0, %s149
      %s171 = sphi 0, %s173
      %s174 = sphi 0, %s171
      %s175 = sphi 0, %s174
      %s191 = sphi 0, %s175
      %s197 = sphi 0, %s199
      %s200 = sphi 0, %s197
      %s201 = sphi 0, %s200
      %s217 = sphi 0, %s201
      %s223 = sphi 0, %s225
      %s226 = sphi 0, %s223
      %s227 = sphi 0, %s226
      %s243 = sphi 0, %s227
      %s249 = sphi 0, %s251
      %s252 = sphi 0, %s249
      %s253 = sphi 0, %s252
      %s269 = sphi 0, %s253
    $region4: #{tpu_custom_call.1} parent=1 // loop_header_branch
      %22 = sbr.rel (%p20) target = $region8
    $region5: #{tpu_custom_call.1} parent=1 // loop_body
      %s24 = ssub.s32 %s19, 1
      %s25 = ssub.s32 %s19, 2
      %s32 = sadd.s32 1, %s27
      %p33 = scmp.ge.s32.totalorder %s32, 2
      %s34 = scalar_select %p33, 0, %s32
      %s35 = sadd.s32 1, %s26
      %s36 = scalar_select %p33, %s35, %s26
      %p37 = scmp.ge.s32.totalorder %s36, 1
      %s38 = scalar_select %p37, 0, %s36
      %s39 = ssub.s32 %s26, %s38
      %p40 = scmp.eq.s32.totalorder %s39, 0
      %s42 = sadd.s32 %s41, 1
      %s43 = scalar_select %p40, %s41, %s42
      %p46 = pneg %p40
      %p47 = scmp.eq.s32.totalorder %s19, 1
      %p48 = por %p46, %p47
      %p49 = scmp.ne.s32.totalorder %s41, %s44
      %p50 = scmp.eq.s32.totalorder %s19, 0
      %p51 = por %p49, %p50
      %p52 = scmp.ne.s32.totalorder %s41, %s44
      %p53 = scmp.eq.s32.totalorder %s24, 1
      %p54 = por %p52, %p53
      %p55 = scmp.ne.s32.totalorder %s44, %s45
      %p56 = scmp.eq.s32.totalorder %s24, 0
      %p57 = por %p55, %p56
      %p58 = scmp.ne.s32.totalorder %s44, %s45
      %p59 = scmp.eq.s32.totalorder %s25, 1
      %p60 = por %p58, %p59
      %p62 = scmp.ne.s32.totalorder %s45, %s61
      %p63 = scmp.eq.s32.totalorder %s25, 0
      %p64 = por %p62, %p63
      %s65 = ssub.s32 %s27, %s34
      %p66 = scmp.eq.s32.totalorder %s65, 0
      %s68 = sadd.s32 %s67, 1
      %s69 = scalar_select %p66, %s67, %s68
      %p72 = pneg %p66
      %p73 = scmp.eq.s32.totalorder %s19, 1
      %p74 = por %p72, %p73
      %p75 = scmp.ne.s32.totalorder %s67, %s70
      %p76 = scmp.eq.s32.totalorder %s19, 0
      %p77 = por %p75, %p76
      %p78 = scmp.ne.s32.totalorder %s67, %s70
      %p79 = scmp.eq.s32.totalorder %s24, 1
      %p80 = por %p78, %p79
      %p81 = scmp.ne.s32.totalorder %s70, %s71
      %p82 = scmp.eq.s32.totalorder %s24, 0
      %p83 = por %p81, %p82
      %p84 = scmp.ne.s32.totalorder %s70, %s71
      %p85 = scmp.eq.s32.totalorder %s25, 1
      %p86 = por %p84, %p85
      %p88 = scmp.ne.s32.totalorder %s71, %s87
      %p89 = scmp.eq.s32.totalorder %s25, 0
      %p90 = por %p88, %p89
      %s91 = ssub.s32 %s27, %s34
      %p92 = scmp.eq.s32.totalorder %s91, 0
      %s94 = sadd.s32 %s93, 1
      %s95 = scalar_select %p92, %s93, %s94
      %p98 = pneg %p92
      %p99 = scmp.eq.s32.totalorder %s19, 1
      %p100 = por %p98, %p99
      %p101 = scmp.ne.s32.totalorder %s93, %s96
      %p102 = scmp.eq.s32.totalorder %s19, 0
      %p103 = por %p101, %p102
      %p104 = scmp.ne.s32.totalorder %s93, %s96
      %p105 = scmp.eq.s32.totalorder %s24, 1
      %p106 = por %p104, %p105
      %p107 = scmp.ne.s32.totalorder %s96, %s97
      %p108 = scmp.eq.s32.totalorder %s24, 0
      %p109 = por %p107, %p108
      %p110 = scmp.ne.s32.totalorder %s96, %s97
      %p111 = scmp.eq.s32.totalorder %s25, 1
      %p112 = por %p110, %p111
      %p114 = scmp.ne.s32.totalorder %s97, %s113
      %p115 = scmp.eq.s32.totalorder %s25, 0
      %p116 = por %p114, %p115
      %s117 = ssub.s32 %s27, %s34
      %p118 = scmp.eq.s32.totalorder %s117, 0
      %s120 = sadd.s32 %s119, 1
      %s121 = scalar_select %p118, %s119, %s120
      %p124 = pneg %p118
      %p125 = scmp.eq.s32.totalorder %s19, 1
      %p126 = por %p124, %p125
      %p127 = scmp.ne.s32.totalorder %s119, %s122
      %p128 = scmp.eq.s32.totalorder %s19, 0
      %p129 = por %p127, %p128
      %p130 = scmp.ne.s32.totalorder %s119, %s122
      %p131 = scmp.eq.s32.totalorder %s24, 1
      %p132 = por %p130, %p131
      %p133 = scmp.ne.s32.totalorder %s122, %s123
      %p134 = scmp.eq.s32.totalorder %s24, 0
      %p135 = por %p133, %p134
      %p136 = scmp.ne.s32.totalorder %s122, %s123
      %p137 = scmp.eq.s32.totalorder %s25, 1
      %p138 = por %p136, %p137
      %p140 = scmp.ne.s32.totalorder %s123, %s139
      %p141 = scmp.eq.s32.totalorder %s25, 0
      %p142 = por %p140, %p141
      %s143 = ssub.s32 %s27, %s34
      %p144 = scmp.eq.s32.totalorder %s143, 0
      %s146 = sadd.s32 %s145, 1
      %s147 = scalar_select %p144, %s145, %s146
      %p150 = pneg %p144
      %p151 = scmp.eq.s32.totalorder %s19, 1
      %p152 = por %p150, %p151
      %p153 = scmp.ne.s32.totalorder %s145, %s148
      %p154 = scmp.eq.s32.totalorder %s19, 0
      %p155 = por %p153, %p154
      %p156 = scmp.ne.s32.totalorder %s145, %s148
      %p157 = scmp.eq.s32.totalorder %s24, 1
      %p158 = por %p156, %p157
      %p159 = scmp.ne.s32.totalorder %s148, %s149
      %p160 = scmp.eq.s32.totalorder %s24, 0
      %p161 = por %p159, %p160
      %p162 = scmp.ne.s32.totalorder %s148, %s149
      %p163 = scmp.eq.s32.totalorder %s25, 1
      %p164 = por %p162, %p163
      %p166 = scmp.ne.s32.totalorder %s149, %s165
      %p167 = scmp.eq.s32.totalorder %s25, 0
      %p168 = por %p166, %p167
      %s169 = ssub.s32 %s27, %s34
      %p170 = scmp.eq.s32.totalorder %s169, 0
      %s172 = sadd.s32 %s171, 1
      %s173 = scalar_select %p170, %s171, %s172
      %p176 = pneg %p170
      %p177 = scmp.eq.s32.totalorder %s19, 1
      %p178 = por %p176, %p177
      %p179 = scmp.ne.s32.totalorder %s171, %s174
      %p180 = scmp.eq.s32.totalorder %s19, 0
      %p181 = por %p179, %p180
      %p182 = scmp.ne.s32.totalorder %s171, %s174
      %p183 = scmp.eq.s32.totalorder %s24, 1
      %p184 = por %p182, %p183
      %p185 = scmp.ne.s32.totalorder %s174, %s175
      %p186 = scmp.eq.s32.totalorder %s24, 0
      %p187 = por %p185, %p186
      %p188 = scmp.ne.s32.totalorder %s174, %s175
      %p189 = scmp.eq.s32.totalorder %s25, 1
      %p190 = por %p188, %p189
      %p192 = scmp.ne.s32.totalorder %s175, %s191
      %p193 = scmp.eq.s32.totalorder %s25, 0
      %p194 = por %p192, %p193
      %s195 = ssub.s32 %s27, %s34
      %p196 = scmp.eq.s32.totalorder %s195, 0
      %s198 = sadd.s32 %s197, 1
      %s199 = scalar_select %p196, %s197, %s198
      %p202 = pneg %p196
      %p203 = scmp.eq.s32.totalorder %s19, 1
      %p204 = por %p202, %p203
      %p205 = scmp.ne.s32.totalorder %s197, %s200
      %p206 = scmp.eq.s32.totalorder %s19, 0
      %p207 = por %p205, %p206
      %p208 = scmp.ne.s32.totalorder %s197, %s200
      %p209 = scmp.eq.s32.totalorder %s24, 1
      %p210 = por %p208, %p209
      %p211 = scmp.ne.s32.totalorder %s200, %s201
      %p212 = scmp.eq.s32.totalorder %s24, 0
      %p213 = por %p211, %p212
      %p214 = scmp.ne.s32.totalorder %s200, %s201
      %p215 = scmp.eq.s32.totalorder %s25, 1
      %p216 = por %p214, %p215
      %p218 = scmp.ne.s32.totalorder %s201, %s217
      %p219 = scmp.eq.s32.totalorder %s25, 0
      %p220 = por %p218, %p219
      %s221 = ssub.s32 %s27, %s34
      %p222 = scmp.eq.s32.totalorder %s221, 0
      %s224 = sadd.s32 %s223, 1
      %s225 = scalar_select %p222, %s223, %s224
      %p228 = pneg %p222
      %p229 = scmp.eq.s32.totalorder %s19, 1
      %p230 = por %p228, %p229
      %p231 = scmp.ne.s32.totalorder %s223, %s226
      %p232 = scmp.eq.s32.totalorder %s19, 0
      %p233 = por %p231, %p232
      %p234 = scmp.ne.s32.totalorder %s223, %s226
      %p235 = scmp.eq.s32.totalorder %s24, 1
      %p236 = por %p234, %p235
      %p237 = scmp.ne.s32.totalorder %s226, %s227
      %p238 = scmp.eq.s32.totalorder %s24, 0
      %p239 = por %p237, %p238
      %p240 = scmp.ne.s32.totalorder %s226, %s227
      %p241 = scmp.eq.s32.totalorder %s25, 1
      %p242 = por %p240, %p241
      %p244 = scmp.ne.s32.totalorder %s227, %s243
      %p245 = scmp.eq.s32.totalorder %s25, 0
      %p246 = por %p244, %p245
      %s247 = ssub.s32 %s26, %s38
      %p248 = scmp.eq.s32.totalorder %s247, 0
      %s250 = sadd.s32 %s249, 1
      %s251 = scalar_select %p248, %s249, %s250
      %p254 = pneg %p248
      %p255 = scmp.eq.s32.totalorder %s19, 1
      %p256 = por %p254, %p255
      %p257 = scmp.ne.s32.totalorder %s249, %s252
      %p258 = scmp.eq.s32.totalorder %s19, 0
      %p259 = por %p257, %p258
      %p260 = scmp.ne.s32.totalorder %s249, %s252
      %p261 = scmp.eq.s32.totalorder %s24, 1
      %p262 = por %p260, %p261
      %p263 = scmp.ne.s32.totalorder %s252, %s253
      %p264 = scmp.eq.s32.totalorder %s24, 0
      %p265 = por %p263, %p264
      %p266 = scmp.ne.s32.totalorder %s252, %s253
      %p267 = scmp.eq.s32.totalorder %s25, 1
      %p268 = por %p266, %p267
      %p270 = scmp.ne.s32.totalorder %s253, %s269
      %p271 = scmp.eq.s32.totalorder %s25, 0
      %p272 = por %p270, %p271
      %p273 = scmp.le.s32.totalorder 1, %s19
      %p274 = scmp.lt.s32.totalorder %s19, 3
      %p275 = pnand %p273, %p274
      %p276 = pneg %p275
      // Predicated region
      $region9: #{tpu_custom_call.1} parent=5 // pred_check
        _
      $region10: #{tpu_custom_call.1} parent=5 // pred_check_branch
        %278 = sbr.rel (%p275) target = $region12
      $region11: #{tpu_custom_call.1} parent=5 // pred_region
        %s279 = ssub.s32 %s19, 1
        // Predicated region
        $region13: #{tpu_custom_call.1} parent=11 // pred_check
          %p280 = pneg %p57
        $region14: #{tpu_custom_call.1} parent=11 // pred_check_branch
          %282 = sbr.rel (%p280) target = $region16
        $region15: #{tpu_custom_call.1} parent=11 // pred_region
          %s283 = smul.u32 2, %s28
          %285 = vsyncadd [#allocation3], 0
          %s286 = smul.addr %s283, 8
          %s287 = scalar_lea.hbm %s0, %s286
          %s288 = sshll.u32 %s287, 4
          %s289 = int_to_ptr.hbm [resolvable:$true] %s288
          %s290 = sshll.u32 [#allocation2], 4
          %s291 = int_to_ptr.vmem [resolvable:$true] %s290
          %296 = dma.hbm_to_vmem [thread:$0]  %s289, 256, %s291, [#allocation3], 128, 128, 8
        $region16: #{tpu_custom_call.1} parent=11 // pred_fallthru
          _
      $region12: #{tpu_custom_call.1} parent=5 // pred_fallthru
        _
      %p297 = scmp.lt.s32.totalorder %s19, 2
      // Predicated region
      $region17: #{tpu_custom_call.1} parent=5 // pred_check
        %p298 = pneg %p297
      $region18: #{tpu_custom_call.1} parent=5 // pred_check_branch
        %300 = sbr.rel (%p298) target = $region20
      $region19: #{tpu_custom_call.1} parent=5 // pred_region
        // Predicated region
        $region21: #{tpu_custom_call.1} parent=19 // pred_check
          %p301 = pneg %p77
        $region22: #{tpu_custom_call.1} parent=19 // pred_check_branch
          %303 = sbr.rel (%p301) target = $region24
        $region23: #{tpu_custom_call.1} parent=19 // pred_region
          %p304 = scmp.lt.s32.totalorder %s27, 1
          %s305 = scalar_select %p304, %s27, 1
          %s306 = smul.addr %s305, 4
          %s307 = smul.addr %s306, 4
          %s308 = scalar_lea.vmem %s1, %s307
        $region24: #{tpu_custom_call.1} parent=19 // pred_fallthru
          _
        // Predicated region
        $region25: #{tpu_custom_call.1} parent=19 // pred_check
          %p309 = pneg %p103
        $region26: #{tpu_custom_call.1} parent=19 // pred_check_branch
          %311 = sbr.rel (%p309) target = $region28
        $region27: #{tpu_custom_call.1} parent=19 // pred_region
          %s312 = sand.u32 %s19, 1
          %s313 = scalar_lea.sflag [#allocation6], %s312
          %s314 = sand.u32 %s93, 1
          %s315 = scalar_lea.vmem [#allocation5], %s314
          %317 = vsyncadd %s313, 0
          %s318 = scalar_lea.hbm %s2, %s27
          %s320 = sshll.u32 %s318, 4
          %s321 = int_to_ptr.hbm [resolvable:$true] %s320
          %s322 = sshll.u32 %s315, 4
          %s323 = int_to_ptr.vmem [resolvable:$true] %s322
          %325 = dma.hbm_to_vmem [thread:$0]  %s321, 16, %s323, %s313
        $region28: #{tpu_custom_call.1} parent=19 // pred_fallthru
          _
        // Predicated region
        $region29: #{tpu_custom_call.1} parent=19 // pred_check
          %p326 = pneg %p129
        $region30: #{tpu_custom_call.1} parent=19 // pred_check_branch
          %328 = sbr.rel (%p326) target = $region32
        $region31: #{tpu_custom_call.1} parent=19 // pred_region
          %p329 = scmp.lt.s32.totalorder %s27, 1
          %s330 = scalar_select %p329, %s27, 1
          %s331 = smul.addr %s330, 4
          %s332 = smul.addr %s331, 4
          %s333 = scalar_lea.vmem %s3, %s332
        $region32: #{tpu_custom_call.1} parent=19 // pred_fallthru
          _
        // Predicated region
        $region33: #{tpu_custom_call.1} parent=19 // pred_check
          %p334 = pneg %p155
        $region34: #{tpu_custom_call.1} parent=19 // pred_check_branch
          %336 = sbr.rel (%p334) target = $region36
        $region35: #{tpu_custom_call.1} parent=19 // pred_region
          %p337 = scmp.lt.s32.totalorder %s27, 1
          %s338 = scalar_select %p337, %s27, 1
          %s339 = smul.addr %s338, 4
          %s340 = smul.addr %s339, 4
          %s341 = scalar_lea.vmem %s4, %s340
        $region36: #{tpu_custom_call.1} parent=19 // pred_fallthru
          _
        // Predicated region
        $region37: #{tpu_custom_call.1} parent=19 // pred_check
          %p342 = pneg %p181
        $region38: #{tpu_custom_call.1} parent=19 // pred_check_branch
          %344 = sbr.rel (%p342) target = $region40
        $region39: #{tpu_custom_call.1} parent=19 // pred_region
          %s345 = sand.u32 %s19, 1
          %s346 = scalar_lea.sflag [#allocation6], %s345
          %s347 = sand.u32 %s171, 1
          %s348 = scalar_lea.vmem [#allocation7], %s347
          %350 = vsyncadd %s346, 0
          %s351 = scalar_lea.hbm %s5, %s27
          %s353 = sshll.u32 %s351, 4
          %s354 = int_to_ptr.hbm [resolvable:$true] %s353
          %s355 = sshll.u32 %s348, 4
          %s356 = int_to_ptr.vmem [resolvable:$true] %s355
          %358 = dma.hbm_to_vmem [thread:$0]  %s354, 16, %s356, %s346
        $region40: #{tpu_custom_call.1} parent=19 // pred_fallthru
          _
        // Predicated region
        $region41: #{tpu_custom_call.1} parent=19 // pred_check
          %p359 = pneg %p207
        $region42: #{tpu_custom_call.1} parent=19 // pred_check_branch
          %361 = sbr.rel (%p359) target = $region44
        $region43: #{tpu_custom_call.1} parent=19 // pred_region
          %p362 = scmp.lt.s32.totalorder %s27, 1
          %s363 = scalar_select %p362, %s27, 1
          %s364 = smul.addr %s363, 8
          %s365 = smul.addr %s364, 4
          %s366 = scalar_lea.vmem %s6, %s365
        $region44: #{tpu_custom_call.1} parent=19 // pred_fallthru
          _
        // Predicated region
        $region45: #{tpu_custom_call.1} parent=19 // pred_check
          %p367 = pneg %p233
        $region46: #{tpu_custom_call.1} parent=19 // pred_check_branch
          %369 = sbr.rel (%p367) target = $region48
        $region47: #{tpu_custom_call.1} parent=19 // pred_region
          %p370 = scmp.lt.s32.totalorder %s27, 1
          %s371 = scalar_select %p370, %s27, 1
          %s372 = smul.addr %s371, 8
          %s373 = scalar_lea.vmem %s7, %s372
        $region48: #{tpu_custom_call.1} parent=19 // pred_fallthru
          _
      $region20: #{tpu_custom_call.1} parent=5 // pred_fallthru
        _
      %p374 = scmp.le.s32.totalorder 1, %s19
      %p375 = scmp.lt.s32.totalorder %s19, 3
      %p376 = pnand %p374, %p375
      %p377 = pneg %p376
      // Predicated region
      $region49: #{tpu_custom_call.1} parent=5 // pred_check
        _
      $region50: #{tpu_custom_call.1} parent=5 // pred_check_branch
        %379 = sbr.rel (%p376) target = $region52
      $region51: #{tpu_custom_call.1} parent=5 // pred_region
        %s380 = ssub.s32 %s19, 1
        // Predicated region
        $region53: #{tpu_custom_call.1} parent=51 // pred_check
          %p381 = pneg %p57
        $region54: #{tpu_custom_call.1} parent=51 // pred_check_branch
          %383 = sbr.rel (%p381) target = $region56
        $region55: #{tpu_custom_call.1} parent=51 // pred_region
          %385 = dma.done [#allocation3], 256
        $region56: #{tpu_custom_call.1} parent=51 // pred_fallthru
          _
        %s386 = sand.u32 %s24, 1
        %s387 = scalar_lea.sflag [#allocation6], %s386
        %s388 = sand.u32 %s96, 1
        %s389 = scalar_lea.vmem [#allocation5], %s388
        // Predicated region
        $region57: #{tpu_custom_call.1} parent=51 // pred_check
          %p390 = pneg %p109
        $region58: #{tpu_custom_call.1} parent=51 // pred_check_branch
          %392 = sbr.rel (%p390) target = $region60
        $region59: #{tpu_custom_call.1} parent=51 // pred_region
          %394 = dma.done %s387, 16
        $region60: #{tpu_custom_call.1} parent=51 // pred_fallthru
          _
        %s395 = sand.u32 %s24, 1
        %s396 = scalar_lea.sflag [#allocation6], %s395
        %s397 = sand.u32 %s174, 1
        %s398 = scalar_lea.vmem [#allocation7], %s397
        // Predicated region
        $region61: #{tpu_custom_call.1} parent=51 // pred_check
          %p399 = pneg %p187
        $region62: #{tpu_custom_call.1} parent=51 // pred_check_branch
          %401 = sbr.rel (%p399) target = $region64
        $region63: #{tpu_custom_call.1} parent=51 // pred_region
          %403 = dma.done %s396, 16
        $region64: #{tpu_custom_call.1} parent=51 // pred_fallthru
          _
        %p404 = pneg %p57
        %p405 = pneg %p54
        %p406 = scmp.lt.s32.totalorder %s29, 1
        %s407 = scalar_select %p406, %s29, 1
        %s408 = smul.addr %s407, 4
        %s409 = smul.addr %s408, 4
        %s410 = scalar_lea.vmem %s1, %s409
        %p411 = pneg %p83
        %p412 = pneg %p80
        %s413 = sand.u32 %s24, 1
        %s414 = scalar_lea.sflag [#allocation6], %s413
        %s415 = sand.u32 %s96, 1
        %s416 = scalar_lea.vmem [#allocation5], %s415
        %p417 = pneg %p109
        %p418 = pneg %p106
        %p419 = scmp.lt.s32.totalorder %s29, 1
        %s420 = scalar_select %p419, %s29, 1
        %s421 = smul.addr %s420, 4
        %s422 = smul.addr %s421, 4
        %s423 = scalar_lea.vmem %s3, %s422
        %p424 = pneg %p135
        %p425 = pneg %p132
        %p426 = scmp.lt.s32.totalorder %s29, 1
        %s427 = scalar_select %p426, %s29, 1
        %s428 = smul.addr %s427, 4
        %s429 = smul.addr %s428, 4
        %s430 = scalar_lea.vmem %s4, %s429
        %p431 = pneg %p161
        %p432 = pneg %p158
        %s433 = sand.u32 %s24, 1
        %s434 = scalar_lea.sflag [#allocation6], %s433
        %s435 = sand.u32 %s174, 1
        %s436 = scalar_lea.vmem [#allocation7], %s435
        %p437 = pneg %p187
        %p438 = pneg %p184
        %p439 = scmp.lt.s32.totalorder %s29, 1
        %s440 = scalar_select %p439, %s29, 1
        %s441 = smul.addr %s440, 8
        %s442 = smul.addr %s441, 4
        %s443 = scalar_lea.vmem %s6, %s442
        %p444 = pneg %p213
        %p445 = pneg %p210
        %p446 = scmp.lt.s32.totalorder %s29, 1
        %s447 = scalar_select %p446, %s29, 1
        %s448 = smul.addr %s447, 8
        %s449 = scalar_lea.vmem %s7, %s448
        %p450 = pneg %p239
        %p451 = pneg %p236
        %p452 = pneg %p265
        %p453 = pneg %p262
        %s454 = smul.u32 2, %s28
        %p455 = scmp.lt.s32.totalorder %s29, 1
        %s456 = scalar_select %p455, %s29, 1
        %s457 = smul.addr %s456, 4
        %s458 = smul.addr %s457, 4
        %s459 = scalar_lea.vmem %s1, %s458
        %p460 = scmp.lt.s32.totalorder %s29, 1
        %s461 = scalar_select %p460, %s29, 1
        %s462 = smul.addr %s461, 4
        %s463 = smul.addr %s462, 4
        %s464 = scalar_lea.vmem %s3, %s463
        %p465 = scmp.lt.s32.totalorder %s29, 1
        %s466 = scalar_select %p465, %s29, 1
        %s467 = smul.addr %s466, 4
        %s468 = smul.addr %s467, 4
        %s469 = scalar_lea.vmem %s4, %s468
        %p470 = scmp.lt.s32.totalorder %s29, 1
        %s471 = scalar_select %p470, %s29, 1
        %s472 = smul.addr %s471, 8
        %s473 = smul.addr %s472, 4
        %s474 = scalar_lea.vmem %s6, %s473
        %p475 = scmp.lt.s32.totalorder %s29, 1
        %s476 = scalar_select %p475, %s29, 1
        %s477 = smul.addr %s476, 8
        %s478 = scalar_lea.vmem %s7, %s477
        %s479 = smul.u32 2, %s28
        %p481 = scmp.eq.s32.totalorder %s29, 0
        // Predicated region
        $region65: #{tpu_custom_call.1} parent=51 // pred_check
          %p482 = pneg %p481
        $region66: #{tpu_custom_call.1} parent=51 // pred_check_branch
          %484 = sbr.rel (%p482) target = $region68
        $region67: #{tpu_custom_call.1} parent=51 // pred_region
          %v485 = vld [vmem:[#allocation2] sm:$0xff]
          %v486 = vld [vmem:[#allocation2 + $0x8] sm:$0xff]
          %vm487 = vcmask 261120
          %488 = vst.msk [vmem:[#allocation8] sm:$0xff] %vm487, %v485
          %489 = vst.msk [vmem:[#allocation8 + $0x8] sm:$0xff] %vm487, %v486
        $region68: #{tpu_custom_call.1} parent=51 // pred_fallthru
          _
        %v490 = vld [vmem:[#allocation8] sm:$0xff]
        %v491 = vld [vmem:[#allocation8 + $0x8] sm:$0xff]
        %v492 = vld [vmem:[%s478] sm:$0x3f]
        %v493 = vpack.c.bf16 %v491, %v490
        %v494 = vld [vmem:[%s459] sm:$0xf]
        %v495 = vld [vmem:[%s459 + $0x4] sm:$0xf]
        %v496 = vld [vmem:[%s459 + $0x8] sm:$0xf]
        %v497 = vld [vmem:[%s459 + $0xc] sm:$0xf]
        %v498 = vld [vmem:[%s389] sm:$0x1]
        %v500 = vperm.slane %v498, 0
        %v506 = vunpack.c.l.b16 %v494
        %v507 = vunpack.c.l.b16 %v495
        %v508 = vunpack.c.l.b16 %v496
        %v509 = vunpack.c.l.b16 %v497
        %v510 = vpack.c.b16 %v507, %v506
        %v511 = vpack.c.b16 %v509, %v508
        %vm514 = vcmask 261120
        %v516 = vsel %vm514, %v493, 0
        %518 = vmatpush.bf16.msra.mxu0 0
        %519 = vmatpush.bf16.msra.mxu0 0
        %520 = vmatpush.bf16.msra.mxu0 0
        %521 = vmatpush.bf16.msra.mxu0 0
        %522 = vmatpush.bf16.msra.mxu0 0
        %523 = vmatpush.bf16.msra.mxu0 0
        %524 = vmatpush.bf16.msra.mxu0 %v511
        %525 = vmatpush.bf16.msra.mxu0 %v510
        %526 = vmatmul.bf16.gmra.mxu0 %v516
        %v527 = vpop.f32.mrf.mxu0
        %v528 = vadd.f32 %v500, %v527
        %v529 = vpop.f32.mrf.mxu0
        %v530 = vadd.f32 %v500, %v529
        %531 = vdwg.mxu0
        %v532 = vmul.f32 %v528, 0.35355338
        %v533 = vmul.f32 %v530, 0.35355338
        %v534 = vpack.c.bf16 %v532, %v532
        %v535 = vpack.c.bf16 %v533, %v533
        %v536 = vpack.c.bf16 %v528, %v528
        %v537 = vpack.c.bf16 %v530, %v530
        %v539 = vunpack.c.l.b16 %v536
        %v540 = vpack.c.b16 %v539, %v539
        %541 = vrot.lane.b32.xlu0 %v540, 96
        %v542 = vpop.permute.xlu0 %541
        %vm543 = vcmask 64512
        %v545 = vsel %vm543, %v534, 0
        %v548 = vsel %vm543, %v542, 0
        %550 = vmatpush.bf16.xpose.msra.mxu0 0
        %551 = vmatpush.bf16.xpose.msra.mxu0 0
        %552 = vmatpush.bf16.xpose.msra.mxu0 0
        %553 = vmatpush.bf16.xpose.msra.mxu0 0
        %554 = vmatpush.bf16.xpose.msra.mxu0 0
        %555 = vmatpush.bf16.xpose.msra.mxu0 0
        %556 = vmatpush.bf16.xpose.msra.mxu0 0
        %557 = vmatpush.bf16.xpose.msra.mxu0 %v548
        %558 = vmatmul.bf16.gmra.mxu0 %v545
        %v559 = vpop.f32.mrf.mxu0
        %v560 = vadd.f32 0.0, %v559
        %v561 = vpop.f32.mrf.mxu0
        %562 = vdwg.mxu0
        %v564 = vunpack.c.l.b16 %v537
        %v565 = vpack.c.b16 %v564, %v564
        %566 = vrot.lane.b32.xlu0 %v565, 96
        %v567 = vpop.permute.xlu0 %566
        %v569 = vsel %vm543, %v535, 0
        %v572 = vsel %vm543, %v567, 0
        %574 = vmatpush.bf16.xpose.msra.mxu0 0
        %575 = vmatpush.bf16.xpose.msra.mxu0 0
        %576 = vmatpush.bf16.xpose.msra.mxu0 0
        %577 = vmatpush.bf16.xpose.msra.mxu0 0
        %578 = vmatpush.bf16.xpose.msra.mxu0 0
        %579 = vmatpush.bf16.xpose.msra.mxu0 0
        %580 = vmatpush.bf16.xpose.msra.mxu0 0
        %581 = vmatpush.bf16.xpose.msra.mxu0 %v572
        %582 = vmatmul.bf16.gmra.mxu0 %v569
        %v583 = vpop.f32.mrf.mxu0
        %v584 = vadd.f32 0.0, %v583
        %v585 = vpop.f32.mrf.mxu0
        %586 = vdwg.mxu0
        %v587 = vsel %vm543, %v560, -inf
        %588 = vmax.xlane.f32.xlu0 %v587
        %v589 = vpop.xlane.xlu0 %588
        %v590 = vsel %vm543, %v584, -inf
        %591 = vmax.xlane.f32.xlu0 %v590
        %v592 = vpop.xlane.xlu0 %591
        %v593 = vsub.f32 %v560, %v589
        %v594 = vsub.f32 %v584, %v592
        %v595 = vmul.f32 %v593, 1.442695
        %v596 = vpow.pop %v595
        %v597 = vmul.f32 %v594, 1.442695
        %v598 = vpow.pop %v597
        %v599 = vsel %vm543, %v596, 0.0
        %600 = vadd.xlane.f32.xlu0 %v599
        %v601 = vpop.xlane.xlu0 %600
        %v602 = vsel %vm543, %v598, 0.0
        %603 = vadd.xlane.f32.xlu0 %v602
        %v604 = vpop.xlane.xlu0 %603
        %v605 = vrcp.pop %v601
        %v606 = vrcp.pop %v604
        %v607 = vmul.f32 %v596, %v605
        %v608 = vmul.f32 %v598, %v606
        %v609 = vpack.c.bf16 %v607, %v607
        %v610 = vpack.c.bf16 %v608, %v608
        %611 = vrot.lane.b32.xlu0 %v540, 64
        %v612 = vpop.permute.xlu0 %611
        %v614 = vsel %vm543, %v609, 0
        %vm616 = vcmask 1043456
        %v618 = vsel %vm616, %v612, 0
        %620 = vmatpush.bf16.msra.mxu0 0
        %621 = vmatpush.bf16.msra.mxu0 0
        %622 = vmatpush.bf16.msra.mxu0 0
        %623 = vmatpush.bf16.msra.mxu0 0
        %624 = vmatpush.bf16.msra.mxu0 0
        %625 = vmatpush.bf16.msra.mxu0 0
        %626 = vmatpush.bf16.msra.mxu0 0
        %627 = vmatpush.bf16.msra.mxu0 %v618
        %628 = vmatmul.bf16.gmra.mxu0 %v614
        %v629 = vpop.f32.mrf.mxu0
        %v630 = vadd.f32 0.0, %v629
        %v631 = vpop.f32.mrf.mxu0
        %632 = vdwg.mxu0
        %633 = vrot.lane.b32.xlu0 %v565, 64
        %v634 = vpop.permute.xlu0 %633
        %v636 = vsel %vm543, %v610, 0
        %v639 = vsel %vm616, %v634, 0
        %641 = vmatpush.bf16.msra.mxu0 0
        %642 = vmatpush.bf16.msra.mxu0 0
        %643 = vmatpush.bf16.msra.mxu0 0
        %644 = vmatpush.bf16.msra.mxu0 0
        %645 = vmatpush.bf16.msra.mxu0 0
        %646 = vmatpush.bf16.msra.mxu0 0
        %647 = vmatpush.bf16.msra.mxu0 0
        %648 = vmatpush.bf16.msra.mxu0 %v639
        %649 = vmatmul.bf16.gmra.mxu0 %v636
        %v650 = vpop.f32.mrf.mxu0
        %v651 = vadd.f32 0.0, %v650
        %v652 = vpop.f32.mrf.mxu0
        %653 = vdwg.mxu0
        %v655 = vunpack.c.l.b16 %v534
        %v656 = vpack.c.b16 %v655, %v655
        %657 = vrot.lane.b32.xlu0 %v656, 120
        %v658 = vpop.permute.xlu0 %657
        %659 = vrot.lane.b32.xlu0 %v540, 88
        %v660 = vpop.permute.xlu0 %659
        %v662 = vsel %vm543, %v658, 0
        %v665 = vsel %vm543, %v660, 0
        %667 = vmatpush.bf16.xpose.msra.mxu0 0
        %668 = vmatpush.bf16.xpose.msra.mxu0 0
        %669 = vmatpush.bf16.xpose.msra.mxu0 0
        %670 = vmatpush.bf16.xpose.msra.mxu0 0
        %671 = vmatpush.bf16.xpose.msra.mxu0 0
        %672 = vmatpush.bf16.xpose.msra.mxu0 0
        %673 = vmatpush.bf16.xpose.msra.mxu0 0
        %674 = vmatpush.bf16.xpose.msra.mxu0 %v665
        %675 = vmatmul.bf16.gmra.mxu0 %v662
        %v676 = vpop.f32.mrf.mxu0
        %v677 = vadd.f32 0.0, %v676
        %v678 = vpop.f32.mrf.mxu0
        %679 = vdwg.mxu0
        %v681 = vunpack.c.l.b16 %v535
        %v682 = vpack.c.b16 %v681, %v681
        %683 = vrot.lane.b32.xlu0 %v682, 120
        %v684 = vpop.permute.xlu0 %683
        %685 = vrot.lane.b32.xlu0 %v565, 88
        %v686 = vpop.permute.xlu0 %685
        %v688 = vsel %vm543, %v684, 0
        %v691 = vsel %vm543, %v686, 0
        %693 = vmatpush.bf16.xpose.msra.mxu0 0
        %694 = vmatpush.bf16.xpose.msra.mxu0 0
        %695 = vmatpush.bf16.xpose.msra.mxu0 0
        %696 = vmatpush.bf16.xpose.msra.mxu0 0
        %697 = vmatpush.bf16.xpose.msra.mxu0 0
        %698 = vmatpush.bf16.xpose.msra.mxu0 0
        %699 = vmatpush.bf16.xpose.msra.mxu0 0
        %700 = vmatpush.bf16.xpose.msra.mxu0 %v691
        %701 = vmatmul.bf16.gmra.mxu0 %v688
        %v702 = vpop.f32.mrf.mxu0
        %v703 = vadd.f32 0.0, %v702
        %v704 = vpop.f32.mrf.mxu0
        %705 = vdwg.mxu0
        %v706 = vsel %vm543, %v677, -inf
        %707 = vmax.xlane.f32.xlu0 %v706
        %v708 = vpop.xlane.xlu0 %707
        %v709 = vsel %vm543, %v703, -inf
        %710 = vmax.xlane.f32.xlu0 %v709
        %v711 = vpop.xlane.xlu0 %710
        %v712 = vsub.f32 %v677, %v708
        %v713 = vsub.f32 %v703, %v711
        %v714 = vmul.f32 %v712, 1.442695
        %v715 = vpow.pop %v714
        %v716 = vmul.f32 %v713, 1.442695
        %v717 = vpow.pop %v716
        %v718 = vsel %vm543, %v715, 0.0
        %719 = vadd.xlane.f32.xlu0 %v718
        %v720 = vpop.xlane.xlu0 %719
        %v721 = vsel %vm543, %v717, 0.0
        %722 = vadd.xlane.f32.xlu0 %v721
        %v723 = vpop.xlane.xlu0 %722
        %v724 = vrcp.pop %v720
        %v725 = vrcp.pop %v723
        %v726 = vmul.f32 %v715, %v724
        %v727 = vmul.f32 %v717, %v725
        %v728 = vpack.c.bf16 %v726, %v726
        %v729 = vpack.c.bf16 %v727, %v727
        %730 = vrot.lane.b32.xlu0 %v540, 56
        %v731 = vpop.permute.xlu0 %730
        %v733 = vsel %vm543, %v728, 0
        %v736 = vsel %vm616, %v731, 0
        %738 = vmatpush.bf16.msra.mxu0 0
        %739 = vmatpush.bf16.msra.mxu0 0
        %740 = vmatpush.bf16.msra.mxu0 0
        %741 = vmatpush.bf16.msra.mxu0 0
        %742 = vmatpush.bf16.msra.mxu0 0
        %743 = vmatpush.bf16.msra.mxu0 0
        %744 = vmatpush.bf16.msra.mxu0 0
        %745 = vmatpush.bf16.msra.mxu0 %v736
        %746 = vmatmul.bf16.gmra.mxu0 %v733
        %v747 = vpop.f32.mrf.mxu0
        %v748 = vadd.f32 0.0, %v747
        %v749 = vpop.f32.mrf.mxu0
        %750 = vdwg.mxu0
        %751 = vrot.lane.b32.xlu0 %v565, 56
        %v752 = vpop.permute.xlu0 %751
        %v754 = vsel %vm543, %v729, 0
        %v757 = vsel %vm616, %v752, 0
        %759 = vmatpush.bf16.msra.mxu0 0
        %760 = vmatpush.bf16.msra.mxu0 0
        %761 = vmatpush.bf16.msra.mxu0 0
        %762 = vmatpush.bf16.msra.mxu0 0
        %763 = vmatpush.bf16.msra.mxu0 0
        %764 = vmatpush.bf16.msra.mxu0 0
        %765 = vmatpush.bf16.msra.mxu0 0
        %766 = vmatpush.bf16.msra.mxu0 %v757
        %767 = vmatmul.bf16.gmra.mxu0 %v754
        %v768 = vpop.f32.mrf.mxu0
        %v769 = vadd.f32 0.0, %v768
        %v770 = vpop.f32.mrf.mxu0
        %771 = vdwg.mxu0
        %772 = vrot.lane.b32.xlu0 %v656, 112
        %v773 = vpop.permute.xlu0 %772
        %774 = vrot.lane.b32.xlu0 %v540, 80
        %v775 = vpop.permute.xlu0 %774
        %v777 = vsel %vm543, %v773, 0
        %v780 = vsel %vm543, %v775, 0
        %782 = vmatpush.bf16.xpose.msra.mxu0 0
        %783 = vmatpush.bf16.xpose.msra.mxu0 0
        %784 = vmatpush.bf16.xpose.msra.mxu0 0
        %785 = vmatpush.bf16.xpose.msra.mxu0 0
        %786 = vmatpush.bf16.xpose.msra.mxu0 0
        %787 = vmatpush.bf16.xpose.msra.mxu0 0
        %788 = vmatpush.bf16.xpose.msra.mxu0 0
        %789 = vmatpush.bf16.xpose.msra.mxu0 %v780
        %790 = vmatmul.bf16.gmra.mxu0 %v777
        %v791 = vpop.f32.mrf.mxu0
        %v792 = vadd.f32 0.0, %v791
        %v793 = vpop.f32.mrf.mxu0
        %794 = vdwg.mxu0
        %795 = vrot.lane.b32.xlu0 %v682, 112
        %v796 = vpop.permute.xlu0 %795
        %797 = vrot.lane.b32.xlu0 %v565, 80
        %v798 = vpop.permute.xlu0 %797
        %v800 = vsel %vm543, %v796, 0
        %v803 = vsel %vm543, %v798, 0
        %805 = vmatpush.bf16.xpose.msra.mxu0 0
        %806 = vmatpush.bf16.xpose.msra.mxu0 0
        %807 = vmatpush.bf16.xpose.msra.mxu0 0
        %808 = vmatpush.bf16.xpose.msra.mxu0 0
        %809 = vmatpush.bf16.xpose.msra.mxu0 0
        %810 = vmatpush.bf16.xpose.msra.mxu0 0
        %811 = vmatpush.bf16.xpose.msra.mxu0 0
        %812 = vmatpush.bf16.xpose.msra.mxu0 %v803
        %813 = vmatmul.bf16.gmra.mxu0 %v800
        %v814 = vpop.f32.mrf.mxu0
        %v815 = vadd.f32 0.0, %v814
        %v816 = vpop.f32.mrf.mxu0
        %817 = vdwg.mxu0
        %v818 = vsel %vm543, %v792, -inf
        %819 = vmax.xlane.f32.xlu0 %v818
        %v820 = vpop.xlane.xlu0 %819
        %v821 = vsel %vm543, %v815, -inf
        %822 = vmax.xlane.f32.xlu0 %v821
        %v823 = vpop.xlane.xlu0 %822
        %v824 = vsub.f32 %v792, %v820
        %v825 = vsub.f32 %v815, %v823
        %v826 = vmul.f32 %v824, 1.442695
        %v827 = vpow.pop %v826
        %v828 = vmul.f32 %v825, 1.442695
        %v829 = vpow.pop %v828
        %v830 = vsel %vm543, %v827, 0.0
        %831 = vadd.xlane.f32.xlu0 %v830
        %v832 = vpop.xlane.xlu0 %831
        %v833 = vsel %vm543, %v829, 0.0
        %834 = vadd.xlane.f32.xlu0 %v833
        %v835 = vpop.xlane.xlu0 %834
        %v836 = vrcp.pop %v832
        %v837 = vrcp.pop %v835
        %v838 = vmul.f32 %v827, %v836
        %v839 = vmul.f32 %v829, %v837
        %v840 = vpack.c.bf16 %v838, %v838
        %v841 = vpack.c.bf16 %v839, %v839
        %842 = vrot.lane.b32.xlu0 %v540, 48
        %v843 = vpop.permute.xlu0 %842
        %v845 = vsel %vm543, %v840, 0
        %v848 = vsel %vm616, %v843, 0
        %850 = vmatpush.bf16.msra.mxu0 0
        %851 = vmatpush.bf16.msra.mxu0 0
        %852 = vmatpush.bf16.msra.mxu0 0
        %853 = vmatpush.bf16.msra.mxu0 0
        %854 = vmatpush.bf16.msra.mxu0 0
        %855 = vmatpush.bf16.msra.mxu0 0
        %856 = vmatpush.bf16.msra.mxu0 0
        %857 = vmatpush.bf16.msra.mxu0 %v848
        %858 = vmatmul.bf16.gmra.mxu0 %v845
        %v859 = vpop.f32.mrf.mxu0
        %v860 = vadd.f32 0.0, %v859
        %v861 = vpop.f32.mrf.mxu0
        %862 = vdwg.mxu0
        %863 = vrot.lane.b32.xlu0 %v565, 48
        %v864 = vpop.permute.xlu0 %863
        %v866 = vsel %vm543, %v841, 0
        %v869 = vsel %vm616, %v864, 0
        %871 = vmatpush.bf16.msra.mxu0 0
        %872 = vmatpush.bf16.msra.mxu0 0
        %873 = vmatpush.bf16.msra.mxu0 0
        %874 = vmatpush.bf16.msra.mxu0 0
        %875 = vmatpush.bf16.msra.mxu0 0
        %876 = vmatpush.bf16.msra.mxu0 0
        %877 = vmatpush.bf16.msra.mxu0 0
        %878 = vmatpush.bf16.msra.mxu0 %v869
        %879 = vmatmul.bf16.gmra.mxu0 %v866
        %v880 = vpop.f32.mrf.mxu0
        %v881 = vadd.f32 0.0, %v880
        %v882 = vpop.f32.mrf.mxu0
        %883 = vdwg.mxu0
        %884 = vrot.lane.b32.xlu0 %v656, 104
        %v885 = vpop.permute.xlu0 %884
        %886 = vrot.lane.b32.xlu0 %v540, 72
        %v887 = vpop.permute.xlu0 %886
        %v889 = vsel %vm543, %v885, 0
        %v892 = vsel %vm543, %v887, 0
        %894 = vmatpush.bf16.xpose.msra.mxu0 0
        %895 = vmatpush.bf16.xpose.msra.mxu0 0
        %896 = vmatpush.bf16.xpose.msra.mxu0 0
        %897 = vmatpush.bf16.xpose.msra.mxu0 0
        %898 = vmatpush.bf16.xpose.msra.mxu0 0
        %899 = vmatpush.bf16.xpose.msra.mxu0 0
        %900 = vmatpush.bf16.xpose.msra.mxu0 0
        %901 = vmatpush.bf16.xpose.msra.mxu0 %v892
        %902 = vmatmul.bf16.gmra.mxu0 %v889
        %v903 = vpop.f32.mrf.mxu0
        %v904 = vadd.f32 0.0, %v903
        %v905 = vpop.f32.mrf.mxu0
        %906 = vdwg.mxu0
        %907 = vrot.lane.b32.xlu0 %v682, 104
        %v908 = vpop.permute.xlu0 %907
        %909 = vrot.lane.b32.xlu0 %v565, 72
        %v910 = vpop.permute.xlu0 %909
        %v912 = vsel %vm543, %v908, 0
        %v915 = vsel %vm543, %v910, 0
        %917 = vmatpush.bf16.xpose.msra.mxu0 0
        %918 = vmatpush.bf16.xpose.msra.mxu0 0
        %919 = vmatpush.bf16.xpose.msra.mxu0 0
        %920 = vmatpush.bf16.xpose.msra.mxu0 0
        %921 = vmatpush.bf16.xpose.msra.mxu0 0
        %922 = vmatpush.bf16.xpose.msra.mxu0 0
        %923 = vmatpush.bf16.xpose.msra.mxu0 0
        %924 = vmatpush.bf16.xpose.msra.mxu0 %v915
        %925 = vmatmul.bf16.gmra.mxu0 %v912
        %v926 = vpop.f32.mrf.mxu0
        %v927 = vadd.f32 0.0, %v926
        %v928 = vpop.f32.mrf.mxu0
        %929 = vdwg.mxu0
        %v930 = vsel %vm543, %v904, -inf
        %931 = vmax.xlane.f32.xlu0 %v930
        %v932 = vpop.xlane.xlu0 %931
        %v933 = vsel %vm543, %v927, -inf
        %934 = vmax.xlane.f32.xlu0 %v933
        %v935 = vpop.xlane.xlu0 %934
        %v936 = vsub.f32 %v904, %v932
        %v937 = vsub.f32 %v927, %v935
        %v938 = vmul.f32 %v936, 1.442695
        %v939 = vpow.pop %v938
        %v940 = vmul.f32 %v937, 1.442695
        %v941 = vpow.pop %v940
        %v942 = vsel %vm543, %v939, 0.0
        %943 = vadd.xlane.f32.xlu0 %v942
        %v944 = vpop.xlane.xlu0 %943
        %v945 = vsel %vm543, %v941, 0.0
        %946 = vadd.xlane.f32.xlu0 %v945
        %v947 = vpop.xlane.xlu0 %946
        %v948 = vrcp.pop %v944
        %v949 = vrcp.pop %v947
        %v950 = vmul.f32 %v939, %v948
        %v951 = vmul.f32 %v941, %v949
        %v952 = vpack.c.bf16 %v950, %v950
        %v953 = vpack.c.bf16 %v951, %v951
        %954 = vrot.lane.b32.xlu0 %v540, 40
        %v955 = vpop.permute.xlu0 %954
        %v957 = vsel %vm543, %v952, 0
        %v960 = vsel %vm616, %v955, 0
        %962 = vmatpush.bf16.msra.mxu0 0
        %963 = vmatpush.bf16.msra.mxu0 0
        %964 = vmatpush.bf16.msra.mxu0 0
        %965 = vmatpush.bf16.msra.mxu0 0
        %966 = vmatpush.bf16.msra.mxu0 0
        %967 = vmatpush.bf16.msra.mxu0 0
        %968 = vmatpush.bf16.msra.mxu0 0
        %969 = vmatpush.bf16.msra.mxu0 %v960
        %970 = vmatmul.bf16.gmra.mxu0 %v957
        %v971 = vpop.f32.mrf.mxu0
        %v972 = vadd.f32 0.0, %v971
        %v973 = vpop.f32.mrf.mxu0
        %974 = vdwg.mxu0
        %975 = vrot.lane.b32.xlu0 %v565, 40
        %v976 = vpop.permute.xlu0 %975
        %v978 = vsel %vm543, %v953, 0
        %v981 = vsel %vm616, %v976, 0
        %983 = vmatpush.bf16.msra.mxu0 0
        %984 = vmatpush.bf16.msra.mxu0 0
        %985 = vmatpush.bf16.msra.mxu0 0
        %986 = vmatpush.bf16.msra.mxu0 0
        %987 = vmatpush.bf16.msra.mxu0 0
        %988 = vmatpush.bf16.msra.mxu0 0
        %989 = vmatpush.bf16.msra.mxu0 0
        %990 = vmatpush.bf16.msra.mxu0 %v981
        %991 = vmatmul.bf16.gmra.mxu0 %v978
        %v992 = vpop.f32.mrf.mxu0
        %v993 = vadd.f32 0.0, %v992
        %v994 = vpop.f32.mrf.mxu0
        %995 = vdwg.mxu0
        %998 = vrot.lane.b32.xlu0 %v748, 8
        %v999 = vpop.permute.xlu0 %998
        %1000 = vrot.lane.b32.xlu0 %v769, 8
        %v1001 = vpop.permute.xlu0 %1000
        %1006 = vrot.lane.b32.xlu0 %v860, 16
        %v1007 = vpop.permute.xlu0 %1006
        %1008 = vrot.lane.b32.xlu0 %v881, 16
        %v1009 = vpop.permute.xlu0 %1008
        %1014 = vrot.lane.b32.xlu0 %v972, 24
        %v1015 = vpop.permute.xlu0 %1014
        %1016 = vrot.lane.b32.xlu0 %v993, 24
        %v1017 = vpop.permute.xlu0 %1016
        %v1020 = vsel %vm543, %v630, %v999
        %v1021 = vsel %vm543, %v651, %v1001
        %vm1022 = vcmask 130048
        %v1023 = vsel %vm1022, %v1020, %v1007
        %v1024 = vsel %vm1022, %v1021, %v1009
        %vm1025 = vcmask 195584
        %v1026 = vsel %vm1025, %v1023, %v1015
        %v1027 = vsel %vm1025, %v1024, %v1017
        %v1028 = vpack.c.bf16 %v1027, %v1026
        %v1029 = vld [vmem:[%s464] sm:$0xf]
        %v1030 = vld [vmem:[%s464 + $0x4] sm:$0xf]
        %v1031 = vld [vmem:[%s464 + $0x8] sm:$0xf]
        %v1032 = vld [vmem:[%s464 + $0xc] sm:$0xf]
        %v1033 = vperm.slane %v492, 0
        %v1038 = vunpack.c.l.b16 %v1029
        %v1039 = vunpack.c.l.b16 %v1030
        %v1040 = vunpack.c.l.b16 %v1031
        %v1041 = vunpack.c.l.b16 %v1032
        %v1042 = vpack.c.b16 %v1039, %v1038
        %v1043 = vpack.c.b16 %v1041, %v1040
        %v1047 = vsel %vm514, %v1028, 0
        %1049 = vmatpush.bf16.msra.mxu0 0
        %1050 = vmatpush.bf16.msra.mxu0 0
        %1051 = vmatpush.bf16.msra.mxu0 0
        %1052 = vmatpush.bf16.msra.mxu0 0
        %1053 = vmatpush.bf16.msra.mxu0 0
        %1054 = vmatpush.bf16.msra.mxu0 0
        %1055 = vmatpush.bf16.msra.mxu0 %v1043
        %1056 = vmatpush.bf16.msra.mxu0 %v1042
        %1057 = vmatmul.bf16.gmra.mxu0 %v1047
        %v1058 = vpop.f32.mrf.mxu0
        %v1059 = vadd.f32 %v1033, %v1058
        %v1060 = vpop.f32.mrf.mxu0
        %v1061 = vadd.f32 %v1033, %v1060
        %1062 = vdwg.mxu0
        %v1063 = vadd.f32 %v490, %v1059
        %v1064 = vadd.f32 %v491, %v1061
        %v1065 = vsel %vm514, %v1063, 0.0
        %1066 = vadd.xlane.f32.xlu0 %v1065
        %v1067 = vpop.xlane.xlu0 %1066
        %v1068 = vsel %vm514, %v1064, 0.0
        %1069 = vadd.xlane.f32.xlu0 %v1068
        %v1070 = vpop.xlane.xlu0 %1069
        %v1071 = vrcp.pop 32.0
        %v1072 = vmul.f32 32.0, %v1071
        %v1073 = vsub.f32 1.0, %v1072
        %v1074 = vmul.f32 %v1071, %v1073
        %v1075 = vadd.f32 %v1071, %v1074
        %vm1076 = vweird.f32 %v1071
        %v1077 = vsel %vm1076, %v1071, %v1075
        %v1078 = vmul.f32 %v1067, %v1077
        %v1079 = vmul.f32 %v1070, %v1077
        %v1080 = vsub.f32 %v1063, %v1078
        %v1081 = vsub.f32 %v1064, %v1079
        %v1082 = vmul.f32 %v1080, %v1080
        %v1083 = vmul.f32 %v1081, %v1081
        %v1084 = vsel %vm514, %v1082, 0.0
        %1085 = vadd.xlane.f32.xlu0 %v1084
        %v1086 = vpop.xlane.xlu0 %1085
        %v1087 = vsel %vm514, %v1083, 0.0
        %1088 = vadd.xlane.f32.xlu0 %v1087
        %v1089 = vpop.xlane.xlu0 %1088
        %v1090 = vmul.f32 %v1086, %v1077
        %v1091 = vmul.f32 %v1089, %v1077
        %v1092 = vadd.f32 %v1090, 1e-05
        %v1093 = vadd.f32 %v1091, 1e-05
        %v1094 = vrsqrt.pop %v1092
        %v1095 = vmul.f32 %v1094, %v1092
        %v1096 = vmul.f32 %v1095, %v1094
        %v1097 = vmul.f32 0.5, %v1096
        %v1098 = vsub.f32 1.5, %v1097
        %v1099 = vmul.f32 %v1094, %v1098
        %vm1100 = vweird.f32 %v1092
        %vm1101 = vweird.f32 %v1094
        %vm1102 = vmor %vm1100, %vm1101
        %v1103 = vsel %vm1102, %v1094, %v1099
        %v1104 = vrsqrt.pop %v1093
        %v1105 = vmul.f32 %v1104, %v1093
        %v1106 = vmul.f32 %v1105, %v1104
        %v1107 = vmul.f32 0.5, %v1106
        %v1108 = vsub.f32 1.5, %v1107
        %v1109 = vmul.f32 %v1104, %v1108
        %vm1110 = vweird.f32 %v1093
        %vm1111 = vweird.f32 %v1104
        %vm1112 = vmor %vm1110, %vm1111
        %v1113 = vsel %vm1112, %v1104, %v1109
        %v1114 = vmul.f32 %v1080, %v1103
        %v1115 = vmul.f32 %v1081, %v1113
        %v1116 = vperm.slane %v492, 2
        %v1117 = vmul.f32 %v1114, %v1116
        %v1118 = vmul.f32 %v1115, %v1116
        %v1119 = vperm.slane %v492, 3
        %v1120 = vadd.f32 %v1117, %v1119
        %v1121 = vadd.f32 %v1118, %v1119
        %v1122 = vpack.c.bf16 %v1121, %v1120
        %v1123 = vld [vmem:[%s469] sm:$0xf]
        %v1124 = vld [vmem:[%s469 + $0x4] sm:$0xf]
        %v1125 = vld [vmem:[%s469 + $0x8] sm:$0xf]
        %v1126 = vld [vmem:[%s469 + $0xc] sm:$0xf]
        %v1127 = vld [vmem:[%s398] sm:$0x1]
        %v1129 = vperm.slane %v1127, 0
        %v1135 = vunpack.c.l.b16 %v1123
        %v1136 = vunpack.c.l.b16 %v1124
        %v1137 = vunpack.c.l.b16 %v1125
        %v1138 = vunpack.c.l.b16 %v1126
        %v1139 = vpack.c.b16 %v1136, %v1135
        %v1140 = vpack.c.b16 %v1138, %v1137
        %v1144 = vsel %vm514, %v1122, 0
        %1146 = vmatpush.bf16.msra.mxu0 0
        %1147 = vmatpush.bf16.msra.mxu0 0
        %1148 = vmatpush.bf16.msra.mxu0 0
        %1149 = vmatpush.bf16.msra.mxu0 0
        %1150 = vmatpush.bf16.msra.mxu0 0
        %1151 = vmatpush.bf16.msra.mxu0 0
        %1152 = vmatpush.bf16.msra.mxu0 %v1140
        %1153 = vmatpush.bf16.msra.mxu0 %v1139
        %1154 = vmatmul.bf16.gmra.mxu0 %v1144
        %v1155 = vpop.f32.mrf.mxu0
        %v1156 = vadd.f32 %v1129, %v1155
        %v1157 = vpop.f32.mrf.mxu0
        %v1158 = vadd.f32 %v1129, %v1157
        %1159 = vdwg.mxu0
        %v1160 = vmax.f32 %v1156, 0.0
        %v1161 = vmax.f32 %v1158, 0.0
        %v1162 = vpack.c.bf16 %v1161, %v1160
        %v1163 = vld [vmem:[%s474] sm:$0xf]
        %v1164 = vld [vmem:[%s474 + $0x4] sm:$0xf]
        %v1165 = vld [vmem:[%s474 + $0x8] sm:$0xf]
        %v1166 = vld [vmem:[%s474 + $0xc] sm:$0xf]
        %v1167 = vld [vmem:[%s474 + $0x10] sm:$0xf]
        %v1168 = vld [vmem:[%s474 + $0x14] sm:$0xf]
        %v1169 = vld [vmem:[%s474 + $0x18] sm:$0xf]
        %v1170 = vld [vmem:[%s474 + $0x1c] sm:$0xf]
        %v1171 = vperm.slane %v492, 1
        %v1180 = vunpack.c.l.b16 %v1163
        %v1181 = vunpack.c.l.b16 %v1164
        %v1182 = vunpack.c.l.b16 %v1165
        %v1183 = vunpack.c.l.b16 %v1166
        %v1184 = vunpack.c.l.b16 %v1167
        %v1185 = vunpack.c.l.b16 %v1168
        %v1186 = vunpack.c.l.b16 %v1169
        %v1187 = vunpack.c.l.b16 %v1170
        %v1188 = vpack.c.b16 %v1181, %v1180
        %v1189 = vpack.c.b16 %v1183, %v1182
        %v1190 = vpack.c.b16 %v1185, %v1184
        %v1191 = vpack.c.b16 %v1187, %v1186
        %vm1196 = vcmask 523264
        %v1198 = vsel %vm1196, %v1162, 0
        %1200 = vmatpush.bf16.msra.mxu0 0
        %1201 = vmatpush.bf16.msra.mxu0 0
        %1202 = vmatpush.bf16.msra.mxu0 0
        %1203 = vmatpush.bf16.msra.mxu0 0
        %1204 = vmatpush.bf16.msra.mxu0 %v1191
        %1205 = vmatpush.bf16.msra.mxu0 %v1190
        %1206 = vmatpush.bf16.msra.mxu0 %v1189
        %1207 = vmatpush.bf16.msra.mxu0 %v1188
        %1208 = vmatmul.bf16.gmra.mxu0 %v1198
        %v1209 = vpop.f32.mrf.mxu0
        %v1210 = vadd.f32 %v1171, %v1209
        %v1211 = vpop.f32.mrf.mxu0
        %v1212 = vadd.f32 %v1171, %v1211
        %1213 = vdwg.mxu0
        %v1214 = vadd.f32 %v1120, %v1210
        %v1215 = vadd.f32 %v1121, %v1212
        %v1216 = vsel %vm514, %v1214, 0.0
        %1217 = vadd.xlane.f32.xlu0 %v1216
        %v1218 = vpop.xlane.xlu0 %1217
        %v1219 = vsel %vm514, %v1215, 0.0
        %1220 = vadd.xlane.f32.xlu0 %v1219
        %v1221 = vpop.xlane.xlu0 %1220
        %v1222 = vmul.f32 %v1218, %v1077
        %v1223 = vmul.f32 %v1221, %v1077
        %v1224 = vsub.f32 %v1214, %v1222
        %v1225 = vsub.f32 %v1215, %v1223
        %v1226 = vmul.f32 %v1224, %v1224
        %v1227 = vmul.f32 %v1225, %v1225
        %v1228 = vsel %vm514, %v1226, 0.0
        %1229 = vadd.xlane.f32.xlu0 %v1228
        %v1230 = vpop.xlane.xlu0 %1229
        %v1231 = vsel %vm514, %v1227, 0.0
        %1232 = vadd.xlane.f32.xlu0 %v1231
        %v1233 = vpop.xlane.xlu0 %1232
        %v1234 = vmul.f32 %v1230, %v1077
        %v1235 = vmul.f32 %v1233, %v1077
        %v1236 = vadd.f32 %v1234, 1e-05
        %v1237 = vadd.f32 %v1235, 1e-05
        %v1238 = vrsqrt.pop %v1236
        %v1239 = vmul.f32 %v1238, %v1236
        %v1240 = vmul.f32 %v1239, %v1238
        %v1241 = vmul.f32 0.5, %v1240
        %v1242 = vsub.f32 1.5, %v1241
        %v1243 = vmul.f32 %v1238, %v1242
        %vm1244 = vweird.f32 %v1236
        %vm1245 = vweird.f32 %v1238
        %vm1246 = vmor %vm1244, %vm1245
        %v1247 = vsel %vm1246, %v1238, %v1243
        %v1248 = vrsqrt.pop %v1237
        %v1249 = vmul.f32 %v1248, %v1237
        %v1250 = vmul.f32 %v1249, %v1248
        %v1251 = vmul.f32 0.5, %v1250
        %v1252 = vsub.f32 1.5, %v1251
        %v1253 = vmul.f32 %v1248, %v1252
        %vm1254 = vweird.f32 %v1237
        %vm1255 = vweird.f32 %v1248
        %vm1256 = vmor %vm1254, %vm1255
        %v1257 = vsel %vm1256, %v1248, %v1253
        %v1258 = vmul.f32 %v1224, %v1247
        %v1259 = vmul.f32 %v1225, %v1257
        %v1260 = vperm.slane %v492, 4
        %v1261 = vmul.f32 %v1258, %v1260
        %v1262 = vmul.f32 %v1259, %v1260
        %v1263 = vperm.slane %v492, 5
        %v1264 = vadd.f32 %v1261, %v1263
        %v1265 = vadd.f32 %v1262, %v1263
        %1266 = vst.msk [vmem:[#allocation8] sm:$0xff] %vm514, %v1264
        %1267 = vst.msk [vmem:[#allocation8 + $0x8] sm:$0xff] %vm514, %v1265
        // Predicated region
        $region69: #{tpu_custom_call.1} parent=51 // pred_check
          %p1268 = pneg %p262
        $region70: #{tpu_custom_call.1} parent=51 // pred_check_branch
          %1270 = sbr.rel (%p1268) target = $region72
        $region71: #{tpu_custom_call.1} parent=51 // pred_region
          %s1271 = smul.u32 2, %s28
          %1273 = vsyncadd [#allocation4], 0
          %s1274 = smul.addr %s1271, 8
          %s1275 = scalar_lea.hbm %s8, %s1274
          %s1276 = sshll.u32 [#allocation8], 4
          %s1277 = int_to_ptr.vmem [resolvable:$true] %s1276
          %s1278 = sshll.u32 %s1275, 4
          %s1279 = int_to_ptr.hbm [resolvable:$true] %s1278
          %1284 = dma.vmem_to_hbm [thread:$0]  %s1277, 256, %s1279, [#allocation4], 128, 128, 8
        $region72: #{tpu_custom_call.1} parent=51 // pred_fallthru
          _
        // Predicated region
        $region73: #{tpu_custom_call.1} parent=51 // pred_check
          %p1285 = pneg %p262
        $region74: #{tpu_custom_call.1} parent=51 // pred_check_branch
          %1287 = sbr.rel (%p1285) target = $region76
        $region75: #{tpu_custom_call.1} parent=51 // pred_region
          %1289 = dma.done [#allocation4], 256
        $region76: #{tpu_custom_call.1} parent=51 // pred_fallthru
          _
      $region52: #{tpu_custom_call.1} parent=5 // pred_fallthru
        _
      %p1290 = scmp.le.s32.totalorder 2, %s19
      // Predicated region
      $region77: #{tpu_custom_call.1} parent=5 // pred_check
        %p1291 = pneg %p1290
      $region78: #{tpu_custom_call.1} parent=5 // pred_check_branch
        %1293 = sbr.rel (%p1291) target = $region80
      $region79: #{tpu_custom_call.1} parent=5 // pred_region
        %s1294 = ssub.s32 %s19, 2
      $region80: #{tpu_custom_call.1} parent=5 // pred_fallthru
        _
    $region6: #{tpu_custom_call.1} parent=1 // loop_footer
      %s23 = sadd.s32 1, %s19
    $region7: #{tpu_custom_call.1} parent=1 // loop_footer_branch
      %18 = sbr.rel target = $region3
    $region8: #{tpu_custom_call.1} parent=1 // loop_exit
      _
    %1295 = vsyncpa [#allocation3], 1
    %s1296 = scalar_lea.sflag [#allocation3], 1
    %1297 = vsyncpa %s1296, 1
    %1298 = vsyncpa [#allocation6], 1
    %s1299 = scalar_lea.sflag [#allocation6], 1
    %1300 = vsyncpa %s1299, 1
    %1301 = vsyncpa [#allocation4], 1
    %s1302 = scalar_lea.sflag [#allocation4], 1
    %1303 = vsyncpa %s1302, 1

</llo_original>
